<compile_context>
chip_gen: v7x
topology: tpu7x:2x2x1
jax: 0.10.0
libtpu: 0.0.40
codegen_flags: <defaults>
</compile_context>

<pallas_src>
import jax
import jax.numpy as jnp
from jax.experimental import pallas as pl
from jax.experimental.pallas import tpu as pltpu


# ----------------------------- Pallas kernels ------------------------------

def build_molecular_call(num_graphs, n_max, nhid, n_layers, ratio):
    """One pallas_call doing all GCN + SAGPool layers for all graphs.

    Inputs : x     [G, N, nhid]  zero-padded node features (layer-1 features
                                 occupy the first 3 columns, rest zero)
             a     [G, N, N]     dense adjacency, A[t, s] = weight of edge s->t
             alive [G, N, 1]     1.0 for real nodes, 0.0 for padding
             w     [L, nhid, nhid], b [L, 1, nhid]     GCNConv params
             wrel / wroot [L, 1, nhid], pb [L, 1, 1]   SAGPool GraphConv params
    Output : readout [G, 1, 2*L*nhid] == cat([gmp_l || gap_l] over layers)
    """
    neg = -1e30

    def kernel(x_ref, a_ref, alive_ref, w_ref, b_ref, wrel_ref, wroot_ref,
               pb_ref, ro_ref):
        x = x_ref[0]                      # (N, nhid)
        a = a_ref[0]                      # (N, N)
        alive = alive_ref[0]              # (N, 1)

        ri = jax.lax.broadcasted_iota(jnp.int32, (n_max, n_max), 0)
        ci = jax.lax.broadcasted_iota(jnp.int32, (n_max, n_max), 1)
        eyef = jnp.where(ri == ci, 1.0, 0.0)          # (N, N) identity

        readouts = []
        for l in range(n_layers):         # static unroll (3 layers)
            w = w_ref[l]                  # (nhid, nhid)
            b = b_ref[l]                  # (1, nhid)
            wrel = wrel_ref[l]            # (1, nhid)
            wroot = wroot_ref[l]          # (1, nhid)
            pb = pb_ref[l]                # (1, 1)

            # --- GCNConv + ReLU: relu(D^-1/2 (A+I) D^-1/2 (X W) + b) ---
            h = jnp.dot(x, w, preferred_element_type=jnp.float32)
            a_hat = a + eyef * alive                      # self loops, live nodes only
            deg = jnp.sum(a_hat, axis=1, keepdims=True)   # (N, 1)
            dinv = jnp.where(deg > 0.0, jax.lax.rsqrt(deg), 0.0)
            agg = dinv * jnp.dot(a_hat, dinv * h,
                                 preferred_element_type=jnp.float32)
            xg = jnp.maximum(agg + b, 0.0)                # (N, nhid)

            # --- SAGPool score: GraphConv(nhid -> 1) on the raw adjacency ---
            nagg = jnp.dot(a, xg, preferred_element_type=jnp.float32)
            score = (jnp.sum(nagg * wrel, axis=1, keepdims=True)
                     + jnp.sum(xg * wroot, axis=1, keepdims=True) + pb)  # (N,1)

            # --- top-k (k = ceil(ratio * n_alive)) via in-kernel ranking ---
            score_row = jnp.sum(eyef * score, axis=0, keepdims=True)     # (1,N)
            alive_row = jnp.sum(eyef * alive, axis=0, keepdims=True)     # (1,N)
            n_alive = jnp.sum(alive, axis=0, keepdims=True)              # (1,1)
            k = jnp.ceil(ratio * n_alive)                                # (1,1)
            higher = jnp.where(score_row > score, 1.0, 0.0) * alive_row  # (N,N)
            rank = jnp.sum(higher, axis=1, keepdims=True)                # (N,1)
            sel = alive * jnp.where(rank < k, 1.0, 0.0)                  # (N,1)
            sel_row = jnp.sum(eyef * sel, axis=0, keepdims=True)         # (1,N)

            # --- tanh gate + [gmp || gap] readout over selected nodes ---
            gated = xg * jnp.tanh(score)
            gmp = jnp.max(jnp.where(sel > 0.0, gated, neg),
                          axis=0, keepdims=True)                         # (1,nhid)
            cnt = jnp.sum(sel, axis=0, keepdims=True)                    # (1,1)
            gap = jnp.sum(gated * sel, axis=0, keepdims=True) / cnt      # (1,nhid)
            readouts.append(gmp)
            readouts.append(gap)

            # --- carry pooled sub-graph (as masks) to the next layer ---
            x = gated * sel
            a = a * sel * sel_row           # filter_adj equivalent
            alive = sel

        ro_ref[0] = jnp.concatenate(readouts, axis=1)     # (1, 2*L*nhid)

    per_graph = lambda g: (g, 0, 0)
    shared = lambda g: (0, 0, 0)
    return pl.pallas_call(
        kernel,
        out_shape=jax.ShapeDtypeStruct((num_graphs, 1, 2 * n_layers * nhid),
                                       jnp.float32),
        grid=(num_graphs,),
        in_specs=[
            pl.BlockSpec((1, n_max, nhid), per_graph),
            pl.BlockSpec((1, n_max, n_max), per_graph),
            pl.BlockSpec((1, n_max, 1), per_graph),
            pl.BlockSpec((n_layers, nhid, nhid), shared),
            pl.BlockSpec((n_layers, 1, nhid), shared),
            pl.BlockSpec((n_layers, 1, nhid), shared),
            pl.BlockSpec((n_layers, 1, nhid), shared),
            pl.BlockSpec((n_layers, 1, 1), shared),
        ],
        out_specs=pl.BlockSpec((1, 1, 2 * n_layers * nhid), per_graph),
        compiler_params=pltpu.CompilerParams(
            dimension_semantics=("parallel",)),
    )


def build_ddi_clf_call(num_graphs, feat_dim, ddi_nhid, num_labels):
    """Fused GCNConv(feat_dim -> ddi_nhid) + ReLU + node_clf Linear + log_softmax."""
    def kernel(f_ref, a_ref, w1_ref, b1_ref, w2_ref, b2_ref, o_ref):
        f = f_ref[...]                    # (G, feat_dim)
        a = a_ref[...]                    # (G, G)
        ri = jax.lax.broadcasted_iota(jnp.int32, (num_graphs, num_graphs), 0)
        ci = jax.lax.broadcasted_iota(jnp.int32, (num_graphs, num_graphs), 1)
        a_hat = a + jnp.where(ri == ci, 1.0, 0.0)
        deg = jnp.sum(a_hat, axis=1, keepdims=True)
        dinv = jnp.where(deg > 0.0, jax.lax.rsqrt(deg), 0.0)
        h = jnp.dot(f, w1_ref[...], preferred_element_type=jnp.float32)
        h = dinv * jnp.dot(a_hat, dinv * h, preferred_element_type=jnp.float32)
        h = jnp.maximum(h + b1_ref[...], 0.0)
        logits = (jnp.dot(h, w2_ref[...], preferred_element_type=jnp.float32)
                  + b2_ref[...])
        m = jnp.max(logits, axis=1, keepdims=True)
        z = logits - m
        lse = jnp.log(jnp.sum(jnp.exp(z), axis=1, keepdims=True))
        o_ref[...] = z - lse

    vmem = pl.BlockSpec(memory_space=pltpu.MemorySpace.VMEM)
    return pl.pallas_call(
        kernel,
        out_shape=jax.ShapeDtypeStruct((num_graphs, num_labels), jnp.float32),
        in_specs=[vmem] * 6,
        out_specs=vmem,
    )


# ------------------------------- forward -----------------------------------

def make_forward(num_graphs, n_max, nhid, ddi_nhid, num_labels, ratio,
                 dropout_p, n_layers=3):
    mol_call = build_molecular_call(num_graphs, n_max, nhid, n_layers, ratio)
    ddi_call = build_ddi_clf_call(num_graphs, 2 * n_layers * nhid, ddi_nhid,
                                  num_labels)
    keep = 1.0 - dropout_p

    @jax.jit
    def forward(packed, x0, a0, alive0, a_ddi, dropout_key):
        ro = mol_call(x0, a0, alive0, packed['w_all'], packed['b_all'],
                      packed['wrel_all'], packed['wroot_all'],
                      packed['pb_all'])
        feat = ro[:, 0, :]                               # [G, 6*nhid]
        # nn.Dropout(p) constructed inline => training mode (inverted dropout)
        mask = jax.random.bernoulli(dropout_key, keep, feat.shape)
        feat = jnp.where(mask, feat / keep, 0.0)
        preds = ddi_call(feat, a_ddi, packed['w_ddi'], packed['b_ddi'],
                         packed['w_clf'], packed['b_clf'])
        return preds, None

    return forward


# --------------------------- params & preprocessing ------------------------

def init_params(key, nhid, ddi_nhid, num_labels, num_features=3, n_layers=3):
    def lin(k, fan_in, fan_out):
        k1, k2 = jax.random.split(k)
        w = jax.random.normal(k1, (fan_in, fan_out), jnp.float32) * 0.1
        b = jax.random.normal(k2, (fan_out,), jnp.float32) * 0.01
        return w, b

    keys = jax.random.split(key, 2 * n_layers + 2)
    conv_in = [num_features] + [nhid] * (n_layers - 1)
    w_all, b_all = [], []
    for l in range(n_layers):
        w, b = lin(keys[l], conv_in[l], nhid)
        # pad conv1's (3, nhid) weight to (nhid, nhid) with zero rows so all
        # layers share one kernel shape (features are zero-padded to match).
        w_pad = jnp.zeros((nhid, nhid), jnp.float32).at[:conv_in[l], :].set(w)
        w_all.append(w_pad)
        b_all.append(b.reshape(1, nhid))
    wrel_all, wroot_all, pb_all = [], [], []
    for l in range(n_layers):
        ka, kb = jax.random.split(keys[n_layers + l])
        w_rel, b_rel = lin(ka, nhid, 1)
        w_root, _ = lin(kb, nhid, 1)       # GraphConv lin_root has no bias
        wrel_all.append(w_rel.reshape(1, nhid))
        wroot_all.append(w_root.reshape(1, nhid))
        pb_all.append(b_rel.reshape(1, 1))
    w_ddi, b_ddi = lin(keys[-2], 2 * n_layers * nhid, ddi_nhid)
    w_clf, b_clf = lin(keys[-1], ddi_nhid, num_labels)
    return {
        'w_all': jnp.stack(w_all), 'b_all': jnp.stack(b_all),
        'wrel_all': jnp.stack(wrel_all), 'wroot_all': jnp.stack(wroot_all),
        'pb_all': jnp.stack(pb_all),
        'w_ddi': w_ddi, 'b_ddi': b_ddi.reshape(1, ddi_nhid),
        'w_clf': w_clf, 'b_clf': b_clf.reshape(1, num_labels),
    }


def preprocess_graphs(modular_data, n_max, nhid):
    """One-time padding / densification: stack into [G, N_MAX, ...] arrays."""
    xs, adjs, alive = [], [], []
    for data in modular_data:
        feats = data['features']
        edges = data['edges']
        n, f = feats.shape
        x = jnp.zeros((n_max, nhid), jnp.float32).at[:n, :f].set(feats)
        a = jnp.zeros((n_max, n_max), jnp.float32).at[
            edges[1], edges[0]].add(1.0)           # A[t, s] = 1 per edge s->t
        m = jnp.zeros((n_max, 1), jnp.float32).at[:n, :].set(1.0)
        xs.append(x); adjs.append(a); alive.append(m)
    return jnp.stack(xs), jnp.stack(adjs), jnp.stack(alive)


def dense_adj(edge_index, num_nodes):
    return jnp.zeros((num_nodes, num_nodes), jnp.float32).at[
        edge_index[1], edge_index[0]].add(1.0)


# --------------------------------- driver -----------------------------------

def make_random_graph(key, n, num_edges, num_feat):
    k1, k2, k3 = jax.random.split(key, 3)
    feats = jax.random.normal(k1, (n, num_feat), jnp.float32)
    src = jax.random.randint(k2, (num_edges,), 0, n)
    off = jax.random.randint(k3, (num_edges,), 1, n)
    dst = (src + off) % n                 # no self loops
    edges = jnp.stack([src, dst]).astype(jnp.int32)
    return {'features': feats, 'edges': edges}


if __name__ == "__main__":
    NHID = 32
    DDI_NHID = 32
    NUM_LABELS = 7
    RATIO = 0.5
    DROPOUT = 0.5
    N_LAYERS = 3

    root = jax.random.PRNGKey(0)
    k_params, k_data, k_ddi, k_drop = jax.random.split(root, 4)

    params = init_params(k_params, NHID, DDI_NHID, NUM_LABELS)

    # small synthetic molecular graphs (node feature dim is forced to 3)
    node_counts = [9, 11, 8, 12, 10, 9]
    G = len(node_counts)
    N_MAX = 16                            # fixed pad size (>= max nodes, mult of 8)
    graph_keys = jax.random.split(k_data, G)
    modular_data = [make_random_graph(gk, n, 2 * n, 3)
                    for gk, n in zip(graph_keys, node_counts)]

    # DDI graph over the 6 molecule nodes
    kd1, kd2 = jax.random.split(k_ddi)
    dsrc = jax.random.randint(kd1, (12,), 0, G)
    doff = jax.random.randint(kd2, (12,), 1, G)
    ddi_edge_index = jnp.stack([dsrc, (dsrc + doff) % G]).astype(jnp.int32)

    x0, a0, alive0 = preprocess_graphs(modular_data, N_MAX, NHID)
    a_ddi = dense_adj(ddi_edge_index, G)

    forward = make_forward(G, N_MAX, NHID, DDI_NHID, NUM_LABELS, RATIO,
                           DROPOUT, N_LAYERS)
    preds, _ = forward(params, x0, a0, alive0, a_ddi, k_drop)
    preds = jax.block_until_ready(preds)
    assert preds.shape == (G, NUM_LABELS)
    assert bool(jnp.all(jnp.isfinite(preds)))
    print("KERNEL_OK")
</pallas_src>

<mosaic_0001>
module attributes {stable_mosaic.version = 11 : i64} {
  func.func @kernel(%arg0: memref<6x192xf32, #tpu.memory_space<vmem>>, %arg1: memref<6x6xf32, #tpu.memory_space<vmem>>, %arg2: memref<192x32xf32, #tpu.memory_space<vmem>>, %arg3: memref<1x32xf32, #tpu.memory_space<vmem>>, %arg4: memref<32x7xf32, #tpu.memory_space<vmem>>, %arg5: memref<1x7xf32, #tpu.memory_space<vmem>>, %arg6: memref<6x7xf32, #tpu.memory_space<vmem>>) attributes {dimension_semantics = [], scalar_prefetch = 0 : i64, scratch_operands = 0 : i64, tpu.core_type = #tpu.core_type<tc>} {
    %c0 = arith.constant 0 : index
    %c0_0 = arith.constant 0 : index
    %0 = vector.load %arg0[%c0, %c0_0] : memref<6x192xf32, #tpu.memory_space<vmem>>, vector<6x192xf32>
    %c0_1 = arith.constant 0 : index
    %c0_2 = arith.constant 0 : index
    %1 = vector.load %arg1[%c0_1, %c0_2] : memref<6x6xf32, #tpu.memory_space<vmem>>, vector<6x6xf32>
    %2 = tpu.iota {dimensions = array<i32: 0>} : vector<6x6xi32>
    %3 = tpu.iota {dimensions = array<i32: 1>} : vector<6x6xi32>
    %4 = arith.cmpi eq, %2, %3 : vector<6x6xi32>
    %cst = arith.constant 1.000000e+00 : f32
    %cst_3 = arith.constant 0.000000e+00 : f32
    %5 = vector.broadcast %cst : f32 to vector<6x6xf32>
    %6 = vector.broadcast %cst_3 : f32 to vector<6x6xf32>
    %7 = arith.select %4, %5, %6 : vector<6x6xi1>, vector<6x6xf32>
    %8 = arith.addf %1, %7 : vector<6x6xf32>
    %cst_4 = arith.constant dense<0.000000e+00> : vector<6xf32>
    %9 = vector.multi_reduction <add>, %8, %cst_4 [1] : vector<6x6xf32> to vector<6xf32>
    %10 = vector.shape_cast %9 : vector<6xf32> to vector<6x1xf32>
    %cst_5 = arith.constant 0.000000e+00 : f32
    %11 = vector.broadcast %cst_5 : f32 to vector<6x1xf32>
    %12 = arith.cmpf ogt, %10, %11 : vector<6x1xf32>
    %13 = math.rsqrt %10 : vector<6x1xf32>
    %cst_6 = arith.constant 0.000000e+00 : f32
    %14 = vector.broadcast %cst_6 : f32 to vector<6x1xf32>
    %15 = arith.select %12, %13, %14 : vector<6x1xi1>, vector<6x1xf32>
    %c0_7 = arith.constant 0 : index
    %c0_8 = arith.constant 0 : index
    %16 = vector.load %arg2[%c0_7, %c0_8] : memref<192x32xf32, #tpu.memory_space<vmem>>, vector<192x32xf32>
    %cst_9 = arith.constant dense<0.000000e+00> : vector<6x32xf32>
    %17 = tpu.matmul %0, %16, %cst_9 {dimension_numbers = #tpu.dot_dimension_numbers<[1], [0], [0], [1], [0, 0, 1, 1], [], []>} : vector<6x192xf32>, vector<192x32xf32>, vector<6x32xf32> -> vector<6x32xf32>
    %18 = vector.broadcast %15 : vector<6x1xf32> to vector<6x32xf32>
    %19 = arith.mulf %18, %17 : vector<6x32xf32>
    %cst_10 = arith.constant dense<0.000000e+00> : vector<6x32xf32>
    %20 = tpu.matmul %8, %19, %cst_10 {dimension_numbers = #tpu.dot_dimension_numbers<[1], [0], [0], [1], [0, 0, 1, 1], [], []>} : vector<6x6xf32>, vector<6x32xf32>, vector<6x32xf32> -> vector<6x32xf32>
    %21 = vector.broadcast %15 : vector<6x1xf32> to vector<6x32xf32>
    %22 = arith.mulf %21, %20 : vector<6x32xf32>
    %c0_11 = arith.constant 0 : index
    %c0_12 = arith.constant 0 : index
    %23 = vector.load %arg3[%c0_11, %c0_12] : memref<1x32xf32, #tpu.memory_space<vmem>>, vector<1x32xf32>
    %24 = vector.broadcast %23 : vector<1x32xf32> to vector<6x32xf32>
    %25 = arith.addf %22, %24 : vector<6x32xf32>
    %cst_13 = arith.constant 0.000000e+00 : f32
    %26 = vector.broadcast %cst_13 : f32 to vector<6x32xf32>
    %27 = arith.maximumf %25, %26 : vector<6x32xf32>
    %c0_14 = arith.constant 0 : index
    %c0_15 = arith.constant 0 : index
    %28 = vector.load %arg4[%c0_14, %c0_15] : memref<32x7xf32, #tpu.memory_space<vmem>>, vector<32x7xf32>
    %cst_16 = arith.constant dense<0.000000e+00> : vector<6x7xf32>
    %29 = tpu.matmul %27, %28, %cst_16 {dimension_numbers = #tpu.dot_dimension_numbers<[1], [0], [0], [1], [0, 0, 1, 1], [], []>} : vector<6x32xf32>, vector<32x7xf32>, vector<6x7xf32> -> vector<6x7xf32>
    %c0_17 = arith.constant 0 : index
    %c0_18 = arith.constant 0 : index
    %30 = vector.load %arg5[%c0_17, %c0_18] : memref<1x7xf32, #tpu.memory_space<vmem>>, vector<1x7xf32>
    %31 = vector.broadcast %30 : vector<1x7xf32> to vector<6x7xf32>
    %32 = arith.addf %29, %31 : vector<6x7xf32>
    %cst_19 = arith.constant dense<0xFF800000> : vector<6xf32>
    %33 = vector.multi_reduction <maximumf>, %32, %cst_19 [1] : vector<6x7xf32> to vector<6xf32>
    %34 = vector.shape_cast %33 : vector<6xf32> to vector<6x1xf32>
    %35 = vector.broadcast %34 : vector<6x1xf32> to vector<6x7xf32>
    %36 = arith.subf %32, %35 : vector<6x7xf32>
    %37 = math.exp %36 : vector<6x7xf32>
    %cst_20 = arith.constant dense<0.000000e+00> : vector<6xf32>
    %38 = vector.multi_reduction <add>, %37, %cst_20 [1] : vector<6x7xf32> to vector<6xf32>
    %39 = vector.shape_cast %38 : vector<6xf32> to vector<6x1xf32>
    %40 = math.log %39 : vector<6x1xf32>
    %41 = vector.broadcast %40 : vector<6x1xf32> to vector<6x7xf32>
    %42 = arith.subf %36, %41 : vector<6x7xf32>
    %c0_21 = arith.constant 0 : index
    %c0_22 = arith.constant 0 : index
    %43 = vector.load %arg6[%c0_21, %c0_22] : memref<6x7xf32, #tpu.memory_space<vmem>>, vector<6x7xf32>
    tpu.vector_store %arg6[%c0_21, %c0_22], %42 {strides = array<i32>} : memref<6x7xf32, #tpu.memory_space<vmem>>, vector<6x7xf32>,
    return
  }
}

module attributes {stable_mosaic.version = 11 : i64} {
  func.func @kernel(%arg0: i32, %arg1: memref<1x16x32xf32, #tpu.memory_space<vmem>>, %arg2: memref<1x16x16xf32, #tpu.memory_space<vmem>>, %arg3: memref<1x16x1xf32, #tpu.memory_space<vmem>>, %arg4: memref<3x32x32xf32, #tpu.memory_space<vmem>>, %arg5: memref<3x1x32xf32, #tpu.memory_space<vmem>>, %arg6: memref<3x1x32xf32, #tpu.memory_space<vmem>>, %arg7: memref<3x1x32xf32, #tpu.memory_space<vmem>>, %arg8: memref<3x1x1xf32, #tpu.memory_space<vmem>>, %arg9: memref<1x1x192xf32, #tpu.memory_space<vmem>>) attributes {dimension_semantics = [#tpu.dimension_semantics<parallel>], iteration_bounds = array<i64: 6>, scalar_prefetch = 0 : i64, scratch_operands = 0 : i64, tpu.core_type = #tpu.core_type<tc>, window_params = [{transform_indices = @transform_0, window_bounds = array<i64: 1, 16, 32>}, {transform_indices = @transform_1, window_bounds = array<i64: 1, 16, 16>}, {transform_indices = @transform_2, window_bounds = array<i64: 1, 16, 1>}, {pipeline_mode = #tpu.pipeline_mode<synchronous>, transform_indices = @transform_3, window_bounds = array<i64: 3, 32, 32>}, {pipeline_mode = #tpu.pipeline_mode<synchronous>, transform_indices = @transform_4, window_bounds = array<i64: 3, 1, 32>}, {pipeline_mode = #tpu.pipeline_mode<synchronous>, transform_indices = @transform_5, window_bounds = array<i64: 3, 1, 32>}, {pipeline_mode = #tpu.pipeline_mode<synchronous>, transform_indices = @transform_6, window_bounds = array<i64: 3, 1, 32>}, {pipeline_mode = #tpu.pipeline_mode<synchronous>, transform_indices = @transform_7, window_bounds = array<i64: 3, 1, 1>}, {transform_indices = @transform_8, window_bounds = array<i64: 1, 1, 192>}]} {
    %c0 = arith.constant 0 : index
    %c0_0 = arith.constant 0 : index
    %c0_1 = arith.constant 0 : index
    %0 = vector.load %arg1[%c0, %c0_0, %c0_1] : memref<1x16x32xf32, #tpu.memory_space<vmem>>, vector<1x16x32xf32>
    %1 = vector.shape_cast %0 : vector<1x16x32xf32> to vector<16x32xf32>
    %c0_2 = arith.constant 0 : index
    %c0_3 = arith.constant 0 : index
    %c0_4 = arith.constant 0 : index
    %2 = vector.load %arg2[%c0_2, %c0_3, %c0_4] : memref<1x16x16xf32, #tpu.memory_space<vmem>>, vector<1x16x16xf32>
    %3 = vector.shape_cast %2 : vector<1x16x16xf32> to vector<16x16xf32>
    %c0_5 = arith.constant 0 : index
    %c0_6 = arith.constant 0 : index
    %c0_7 = arith.constant 0 : index
    %4 = vector.load %arg3[%c0_5, %c0_6, %c0_7] : memref<1x16x1xf32, #tpu.memory_space<vmem>>, vector<1x16x1xf32>
    %5 = vector.shape_cast %4 : vector<1x16x1xf32> to vector<16x1xf32>
    %6 = tpu.iota {dimensions = array<i32: 0>} : vector<16x16xi32>
    %7 = tpu.iota {dimensions = array<i32: 1>} : vector<16x16xi32>
    %8 = arith.cmpi eq, %6, %7 : vector<16x16xi32>
    %cst = arith.constant 1.000000e+00 : f32
    %cst_8 = arith.constant 0.000000e+00 : f32
    %9 = vector.broadcast %cst : f32 to vector<16x16xf32>
    %10 = vector.broadcast %cst_8 : f32 to vector<16x16xf32>
    %11 = arith.select %8, %9, %10 : vector<16x16xi1>, vector<16x16xf32>
    %c0_9 = arith.constant 0 : index
    %c0_10 = arith.constant 0 : index
    %c0_11 = arith.constant 0 : index
    %12 = vector.load %arg4[%c0_9, %c0_10, %c0_11] : memref<3x32x32xf32, #tpu.memory_space<vmem>>, vector<1x32x32xf32>
    %13 = vector.shape_cast %12 : vector<1x32x32xf32> to vector<32x32xf32>
    %c0_12 = arith.constant 0 : index
    %c0_13 = arith.constant 0 : index
    %c0_14 = arith.constant 0 : index
    %14 = vector.load %arg5[%c0_12, %c0_13, %c0_14] : memref<3x1x32xf32, #tpu.memory_space<vmem>>, vector<1x1x32xf32>
    %15 = vector.shape_cast %14 : vector<1x1x32xf32> to vector<1x32xf32>
    %c0_15 = arith.constant 0 : index
    %c0_16 = arith.constant 0 : index
    %c0_17 = arith.constant 0 : index
    %16 = vector.load %arg6[%c0_15, %c0_16, %c0_17] : memref<3x1x32xf32, #tpu.memory_space<vmem>>, vector<1x1x32xf32>
    %17 = vector.shape_cast %16 : vector<1x1x32xf32> to vector<1x32xf32>
    %c0_18 = arith.constant 0 : index
    %c0_19 = arith.constant 0 : index
    %c0_20 = arith.constant 0 : index
    %18 = vector.load %arg7[%c0_18, %c0_19, %c0_20] : memref<3x1x32xf32, #tpu.memory_space<vmem>>, vector<1x1x32xf32>
    %19 = vector.shape_cast %18 : vector<1x1x32xf32> to vector<1x32xf32>
    %c0_21 = arith.constant 0 : index
    %c0_22 = arith.constant 0 : index
    %c0_23 = arith.constant 0 : index
    %20 = vector.load %arg8[%c0_21, %c0_22, %c0_23] : memref<3x1x1xf32, #tpu.memory_space<vmem>>, vector<1x1x1xf32>
    %21 = vector.shape_cast %20 : vector<1x1x1xf32> to vector<1x1xf32>
    %cst_24 = arith.constant dense<0.000000e+00> : vector<16x32xf32>
    %22 = tpu.matmul %1, %13, %cst_24 {dimension_numbers = #tpu.dot_dimension_numbers<[1], [0], [0], [1], [0, 0, 1, 1], [], []>} : vector<16x32xf32>, vector<32x32xf32>, vector<16x32xf32> -> vector<16x32xf32>
    %23 = vector.broadcast %5 : vector<16x1xf32> to vector<16x16xf32>
    %24 = arith.mulf %11, %23 : vector<16x16xf32>
    %25 = arith.addf %3, %24 : vector<16x16xf32>
    %cst_25 = arith.constant dense<0.000000e+00> : vector<16xf32>
    %26 = vector.multi_reduction <add>, %25, %cst_25 [1] : vector<16x16xf32> to vector<16xf32>
    %27 = vector.shape_cast %26 : vector<16xf32> to vector<16x1xf32>
    %cst_26 = arith.constant 0.000000e+00 : f32
    %28 = vector.broadcast %cst_26 : f32 to vector<16x1xf32>
    %29 = arith.cmpf ogt, %27, %28 : vector<16x1xf32>
    %30 = math.rsqrt %27 : vector<16x1xf32>
    %cst_27 = arith.constant 0.000000e+00 : f32
    %31 = vector.broadcast %cst_27 : f32 to vector<16x1xf32>
    %32 = arith.select %29, %30, %31 : vector<16x1xi1>, vector<16x1xf32>
    %33 = vector.broadcast %32 : vector<16x1xf32> to vector<16x32xf32>
    %34 = arith.mulf %33, %22 : vector<16x32xf32>
    %cst_28 = arith.constant dense<0.000000e+00> : vector<16x32xf32>
    %35 = tpu.matmul %25, %34, %cst_28 {dimension_numbers = #tpu.dot_dimension_numbers<[1], [0], [0], [1], [0, 0, 1, 1], [], []>} : vector<16x16xf32>, vector<16x32xf32>, vector<16x32xf32> -> vector<16x32xf32>
    %36 = vector.broadcast %32 : vector<16x1xf32> to vector<16x32xf32>
    %37 = arith.mulf %36, %35 : vector<16x32xf32>
    %38 = vector.broadcast %15 : vector<1x32xf32> to vector<16x32xf32>
    %39 = arith.addf %37, %38 : vector<16x32xf32>
    %cst_29 = arith.constant 0.000000e+00 : f32
    %40 = vector.broadcast %cst_29 : f32 to vector<16x32xf32>
    %41 = arith.maximumf %39, %40 : vector<16x32xf32>
    %cst_30 = arith.constant dense<0.000000e+00> : vector<16x32xf32>
    %42 = tpu.matmul %3, %41, %cst_30 {dimension_numbers = #tpu.dot_dimension_numbers<[1], [0], [0], [1], [0, 0, 1, 1], [], []>} : vector<16x16xf32>, vector<16x32xf32>, vector<16x32xf32> -> vector<16x32xf32>
    %43 = vector.broadcast %17 : vector<1x32xf32> to vector<16x32xf32>
    %44 = arith.mulf %42, %43 : vector<16x32xf32>
    %cst_31 = arith.constant dense<0.000000e+00> : vector<16xf32>
    %45 = vector.multi_reduction <add>, %44, %cst_31 [1] : vector<16x32xf32> to vector<16xf32>
    %46 = vector.shape_cast %45 : vector<16xf32> to vector<16x1xf32>
    %47 = vector.broadcast %19 : vector<1x32xf32> to vector<16x32xf32>
    %48 = arith.mulf %41, %47 : vector<16x32xf32>
    %cst_32 = arith.constant dense<0.000000e+00> : vector<16xf32>
    %49 = vector.multi_reduction <add>, %48, %cst_32 [1] : vector<16x32xf32> to vector<16xf32>
    %50 = vector.shape_cast %49 : vector<16xf32> to vector<16x1xf32>
    %51 = arith.addf %46, %50 : vector<16x1xf32>
    %52 = vector.broadcast %21 : vector<1x1xf32> to vector<16x1xf32>
    %53 = arith.addf %51, %52 : vector<16x1xf32>
    %54 = vector.broadcast %53 : vector<16x1xf32> to vector<16x16xf32>
    %55 = arith.mulf %11, %54 : vector<16x16xf32>
    %cst_33 = arith.constant dense<0.000000e+00> : vector<16xf32>
    %56 = vector.multi_reduction <add>, %55, %cst_33 [0] : vector<16x16xf32> to vector<16xf32>
    %57 = vector.shape_cast %56 : vector<16xf32> to vector<1x16xf32>
    %58 = vector.broadcast %5 : vector<16x1xf32> to vector<16x16xf32>
    %59 = arith.mulf %11, %58 : vector<16x16xf32>
    %cst_34 = arith.constant dense<0.000000e+00> : vector<16xf32>
    %60 = vector.multi_reduction <add>, %59, %cst_34 [0] : vector<16x16xf32> to vector<16xf32>
    %61 = vector.shape_cast %60 : vector<16xf32> to vector<1x16xf32>
    %cst_35 = arith.constant dense<0.000000e+00> : vector<1xf32>
    %62 = vector.multi_reduction <add>, %5, %cst_35 [0] : vector<16x1xf32> to vector<1xf32>
    %63 = vector.shape_cast %62 : vector<1xf32> to vector<1x1xf32>
    %cst_36 = arith.constant 5.000000e-01 : f32
    %64 = vector.broadcast %cst_36 : f32 to vector<1x1xf32>
    %65 = arith.mulf %64, %63 : vector<1x1xf32>
    %66 = math.ceil %65 : vector<1x1xf32>
    %67 = vector.broadcast %57 : vector<1x16xf32> to vector<16x16xf32>
    %68 = vector.broadcast %53 : vector<16x1xf32> to vector<16x16xf32>
    %69 = arith.cmpf ogt, %67, %68 : vector<16x16xf32>
    %cst_37 = arith.constant 1.000000e+00 : f32
    %cst_38 = arith.constant 0.000000e+00 : f32
    %70 = vector.broadcast %cst_37 : f32 to vector<16x16xf32>
    %71 = vector.broadcast %cst_38 : f32 to vector<16x16xf32>
    %72 = arith.select %69, %70, %71 : vector<16x16xi1>, vector<16x16xf32>
    %73 = vector.broadcast %61 : vector<1x16xf32> to vector<16x16xf32>
    %74 = arith.mulf %72, %73 : vector<16x16xf32>
    %cst_39 = arith.constant dense<0.000000e+00> : vector<16xf32>
    %75 = vector.multi_reduction <add>, %74, %cst_39 [1] : vector<16x16xf32> to vector<16xf32>
    %76 = vector.shape_cast %75 : vector<16xf32> to vector<16x1xf32>
    %77 = vector.broadcast %66 : vector<1x1xf32> to vector<16x1xf32>
    %78 = arith.cmpf olt, %76, %77 : vector<16x1xf32>
    %cst_40 = arith.constant 1.000000e+00 : f32
    %cst_41 = arith.constant 0.000000e+00 : f32
    %79 = vector.broadcast %cst_40 : f32 to vector<16x1xf32>
    %80 = vector.broadcast %cst_41 : f32 to vector<16x1xf32>
    %81 = arith.select %78, %79, %80 : vector<16x1xi1>, vector<16x1xf32>
    %82 = arith.mulf %5, %81 : vector<16x1xf32>
    %83 = vector.broadcast %82 : vector<16x1xf32> to vector<16x16xf32>
    %84 = arith.mulf %11, %83 : vector<16x16xf32>
    %cst_42 = arith.constant dense<0.000000e+00> : vector<16xf32>
    %85 = vector.multi_reduction <add>, %84, %cst_42 [0] : vector<16x16xf32> to vector<16xf32>
    %86 = vector.shape_cast %85 : vector<16xf32> to vector<1x16xf32>
    %87 = math.tanh %53 : vector<16x1xf32>
    %88 = vector.broadcast %87 : vector<16x1xf32> to vector<16x32xf32>
    %89 = arith.mulf %41, %88 : vector<16x32xf32>
    %cst_43 = arith.constant 0.000000e+00 : f32
    %90 = vector.broadcast %cst_43 : f32 to vector<16x1xf32>
    %91 = arith.cmpf ogt, %82, %90 : vector<16x1xf32>
    %cst_44 = arith.constant -1.000000e+30 : f32
    %92 = vector.shape_cast %91 : vector<16x1xi1> to vector<16x1xi1>
    %93 = vector.broadcast %92 : vector<16x1xi1> to vector<16x32xi1>
    %94 = vector.broadcast %cst_44 : f32 to vector<16x32xf32>
    %95 = arith.select %93, %89, %94 : vector<16x32xi1>, vector<16x32xf32>
    %cst_45 = arith.constant dense<0xFF800000> : vector<32xf32>
    %96 = vector.multi_reduction <maximumf>, %95, %cst_45 [0] : vector<16x32xf32> to vector<32xf32>
    %97 = vector.shape_cast %96 : vector<32xf32> to vector<1x32xf32>
    %cst_46 = arith.constant dense<0.000000e+00> : vector<1xf32>
    %98 = vector.multi_reduction <add>, %82, %cst_46 [0] : vector<16x1xf32> to vector<1xf32>
    %99 = vector.shape_cast %98 : vector<1xf32> to vector<1x1xf32>
    %100 = vector.broadcast %82 : vector<16x1xf32> to vector<16x32xf32>
    %101 = arith.mulf %89, %100 : vector<16x32xf32>
    %cst_47 = arith.constant dense<0.000000e+00> : vector<32xf32>
    %102 = vector.multi_reduction <add>, %101, %cst_47 [0] : vector<16x32xf32> to vector<32xf32>
    %103 = vector.shape_cast %102 : vector<32xf32> to vector<1x32xf32>
    %104 = vector.broadcast %99 : vector<1x1xf32> to vector<1x32xf32>
    %105 = arith.divf %103, %104 : vector<1x32xf32>
    %106 = vector.broadcast %82 : vector<16x1xf32> to vector<16x32xf32>
    %107 = arith.mulf %89, %106 : vector<16x32xf32>
    %108 = vector.broadcast %82 : vector<16x1xf32> to vector<16x16xf32>
    %109 = arith.mulf %3, %108 : vector<16x16xf32>
    %110 = vector.broadcast %86 : vector<1x16xf32> to vector<16x16xf32>
    %111 = arith.mulf %109, %110 : vector<16x16xf32>
    %c1 = arith.constant 1 : index
    %c0_48 = arith.constant 0 : index
    %c0_49 = arith.constant 0 : index
    %112 = vector.load %arg4[%c1, %c0_48, %c0_49] : memref<3x32x32xf32, #tpu.memory_space<vmem>>, vector<1x32x32xf32>
    %113 = vector.shape_cast %112 : vector<1x32x32xf32> to vector<32x32xf32>
    %c1_50 = arith.constant 1 : index
    %c0_51 = arith.constant 0 : index
    %c0_52 = arith.constant 0 : index
    %114 = vector.load %arg5[%c1_50, %c0_51, %c0_52] : memref<3x1x32xf32, #tpu.memory_space<vmem>>, vector<1x1x32xf32>
    %115 = vector.shape_cast %114 : vector<1x1x32xf32> to vector<1x32xf32>
    %c1_53 = arith.constant 1 : index
    %c0_54 = arith.constant 0 : index
    %c0_55 = arith.constant 0 : index
    %116 = vector.load %arg6[%c1_53, %c0_54, %c0_55] : memref<3x1x32xf32, #tpu.memory_space<vmem>>, vector<1x1x32xf32>
    %117 = vector.shape_cast %116 : vector<1x1x32xf32> to vector<1x32xf32>
    %c1_56 = arith.constant 1 : index
    %c0_57 = arith.constant 0 : index
    %c0_58 = arith.constant 0 : index
    %118 = vector.load %arg7[%c1_56, %c0_57, %c0_58] : memref<3x1x32xf32, #tpu.memory_space<vmem>>, vector<1x1x32xf32>
    %119 = vector.shape_cast %118 : vector<1x1x32xf32> to vector<1x32xf32>
    %c1_59 = arith.constant 1 : index
    %c0_60 = arith.constant 0 : index
    %c0_61 = arith.constant 0 : index
    %120 = vector.load %arg8[%c1_59, %c0_60, %c0_61] : memref<3x1x1xf32, #tpu.memory_space<vmem>>, vector<1x1x1xf32>
    %121 = vector.shape_cast %120 : vector<1x1x1xf32> to vector<1x1xf32>
    %cst_62 = arith.constant dense<0.000000e+00> : vector<16x32xf32>
    %122 = tpu.matmul %107, %113, %cst_62 {dimension_numbers = #tpu.dot_dimension_numbers<[1], [0], [0], [1], [0, 0, 1, 1], [], []>} : vector<16x32xf32>, vector<32x32xf32>, vector<16x32xf32> -> vector<16x32xf32>
    %123 = vector.broadcast %82 : vector<16x1xf32> to vector<16x16xf32>
    %124 = arith.mulf %11, %123 : vector<16x16xf32>
    %125 = arith.addf %111, %124 : vector<16x16xf32>
    %cst_63 = arith.constant dense<0.000000e+00> : vector<16xf32>
    %126 = vector.multi_reduction <add>, %125, %cst_63 [1] : vector<16x16xf32> to vector<16xf32>
    %127 = vector.shape_cast %126 : vector<16xf32> to vector<16x1xf32>
    %cst_64 = arith.constant 0.000000e+00 : f32
    %128 = vector.broadcast %cst_64 : f32 to vector<16x1xf32>
    %129 = arith.cmpf ogt, %127, %128 : vector<16x1xf32>
    %130 = math.rsqrt %127 : vector<16x1xf32>
    %cst_65 = arith.constant 0.000000e+00 : f32
    %131 = vector.broadcast %cst_65 : f32 to vector<16x1xf32>
    %132 = arith.select %129, %130, %131 : vector<16x1xi1>, vector<16x1xf32>
    %133 = vector.broadcast %132 : vector<16x1xf32> to vector<16x32xf32>
    %134 = arith.mulf %133, %122 : vector<16x32xf32>
    %cst_66 = arith.constant dense<0.000000e+00> : vector<16x32xf32>
    %135 = tpu.matmul %125, %134, %cst_66 {dimension_numbers = #tpu.dot_dimension_numbers<[1], [0], [0], [1], [0, 0, 1, 1], [], []>} : vector<16x16xf32>, vector<16x32xf32>, vector<16x32xf32> -> vector<16x32xf32>
    %136 = vector.broadcast %132 : vector<16x1xf32> to vector<16x32xf32>
    %137 = arith.mulf %136, %135 : vector<16x32xf32>
    %138 = vector.broadcast %115 : vector<1x32xf32> to vector<16x32xf32>
    %139 = arith.addf %137, %138 : vector<16x32xf32>
    %cst_67 = arith.constant 0.000000e+00 : f32
    %140 = vector.broadcast %cst_67 : f32 to vector<16x32xf32>
    %141 = arith.maximumf %139, %140 : vector<16x32xf32>
    %cst_68 = arith.constant dense<0.000000e+00> : vector<16x32xf32>
    %142 = tpu.matmul %111, %141, %cst_68 {dimension_numbers = #tpu.dot_dimension_numbers<[1], [0], [0], [1], [0, 0, 1, 1], [], []>} : vector<16x16xf32>, vector<16x32xf32>, vector<16x32xf32> -> vector<16x32xf32>
    %143 = vector.broadcast %117 : vector<1x32xf32> to vector<16x32xf32>
    %144 = arith.mulf %142, %143 : vector<16x32xf32>
    %cst_69 = arith.constant dense<0.000000e+00> : vector<16xf32>
    %145 = vector.multi_reduction <add>, %144, %cst_69 [1] : vector<16x32xf32> to vector<16xf32>
    %146 = vector.shape_cast %145 : vector<16xf32> to vector<16x1xf32>
    %147 = vector.broadcast %119 : vector<1x32xf32> to vector<16x32xf32>
    %148 = arith.mulf %141, %147 : vector<16x32xf32>
    %cst_70 = arith.constant dense<0.000000e+00> : vector<16xf32>
    %149 = vector.multi_reduction <add>, %148, %cst_70 [1] : vector<16x32xf32> to vector<16xf32>
    %150 = vector.shape_cast %149 : vector<16xf32> to vector<16x1xf32>
    %151 = arith.addf %146, %150 : vector<16x1xf32>
    %152 = vector.broadcast %121 : vector<1x1xf32> to vector<16x1xf32>
    %153 = arith.addf %151, %152 : vector<16x1xf32>
    %154 = vector.broadcast %153 : vector<16x1xf32> to vector<16x16xf32>
    %155 = arith.mulf %11, %154 : vector<16x16xf32>
    %cst_71 = arith.constant dense<0.000000e+00> : vector<16xf32>
    %156 = vector.multi_reduction <add>, %155, %cst_71 [0] : vector<16x16xf32> to vector<16xf32>
    %157 = vector.shape_cast %156 : vector<16xf32> to vector<1x16xf32>
    %158 = vector.broadcast %82 : vector<16x1xf32> to vector<16x16xf32>
    %159 = arith.mulf %11, %158 : vector<16x16xf32>
    %cst_72 = arith.constant dense<0.000000e+00> : vector<16xf32>
    %160 = vector.multi_reduction <add>, %159, %cst_72 [0] : vector<16x16xf32> to vector<16xf32>
    %161 = vector.shape_cast %160 : vector<16xf32> to vector<1x16xf32>
    %cst_73 = arith.constant dense<0.000000e+00> : vector<1xf32>
    %162 = vector.multi_reduction <add>, %82, %cst_73 [0] : vector<16x1xf32> to vector<1xf32>
    %163 = vector.shape_cast %162 : vector<1xf32> to vector<1x1xf32>
    %cst_74 = arith.constant 5.000000e-01 : f32
    %164 = vector.broadcast %cst_74 : f32 to vector<1x1xf32>
    %165 = arith.mulf %164, %163 : vector<1x1xf32>
    %166 = math.ceil %165 : vector<1x1xf32>
    %167 = vector.broadcast %157 : vector<1x16xf32> to vector<16x16xf32>
    %168 = vector.broadcast %153 : vector<16x1xf32> to vector<16x16xf32>
    %169 = arith.cmpf ogt, %167, %168 : vector<16x16xf32>
    %cst_75 = arith.constant 1.000000e+00 : f32
    %cst_76 = arith.constant 0.000000e+00 : f32
    %170 = vector.broadcast %cst_75 : f32 to vector<16x16xf32>
    %171 = vector.broadcast %cst_76 : f32 to vector<16x16xf32>
    %172 = arith.select %169, %170, %171 : vector<16x16xi1>, vector<16x16xf32>
    %173 = vector.broadcast %161 : vector<1x16xf32> to vector<16x16xf32>
    %174 = arith.mulf %172, %173 : vector<16x16xf32>
    %cst_77 = arith.constant dense<0.000000e+00> : vector<16xf32>
    %175 = vector.multi_reduction <add>, %174, %cst_77 [1] : vector<16x16xf32> to vector<16xf32>
    %176 = vector.shape_cast %175 : vector<16xf32> to vector<16x1xf32>
    %177 = vector.broadcast %166 : vector<1x1xf32> to vector<16x1xf32>
    %178 = arith.cmpf olt, %176, %177 : vector<16x1xf32>
    %cst_78 = arith.constant 1.000000e+00 : f32
    %cst_79 = arith.constant 0.000000e+00 : f32
    %179 = vector.broadcast %cst_78 : f32 to vector<16x1xf32>
    %180 = vector.broadcast %cst_79 : f32 to vector<16x1xf32>
    %181 = arith.select %178, %179, %180 : vector<16x1xi1>, vector<16x1xf32>
    %182 = arith.mulf %82, %181 : vector<16x1xf32>
    %183 = vector.broadcast %182 : vector<16x1xf32> to vector<16x16xf32>
    %184 = arith.mulf %11, %183 : vector<16x16xf32>
    %cst_80 = arith.constant dense<0.000000e+00> : vector<16xf32>
    %185 = vector.multi_reduction <add>, %184, %cst_80 [0] : vector<16x16xf32> to vector<16xf32>
    %186 = vector.shape_cast %185 : vector<16xf32> to vector<1x16xf32>
    %187 = math.tanh %153 : vector<16x1xf32>
    %188 = vector.broadcast %187 : vector<16x1xf32> to vector<16x32xf32>
    %189 = arith.mulf %141, %188 : vector<16x32xf32>
    %cst_81 = arith.constant 0.000000e+00 : f32
    %190 = vector.broadcast %cst_81 : f32 to vector<16x1xf32>
    %191 = arith.cmpf ogt, %182, %190 : vector<16x1xf32>
    %cst_82 = arith.constant -1.000000e+30 : f32
    %192 = vector.shape_cast %191 : vector<16x1xi1> to vector<16x1xi1>
    %193 = vector.broadcast %192 : vector<16x1xi1> to vector<16x32xi1>
    %194 = vector.broadcast %cst_82 : f32 to vector<16x32xf32>
    %195 = arith.select %193, %189, %194 : vector<16x32xi1>, vector<16x32xf32>
    %cst_83 = arith.constant dense<0xFF800000> : vector<32xf32>
    %196 = vector.multi_reduction <maximumf>, %195, %cst_83 [0] : vector<16x32xf32> to vector<32xf32>
    %197 = vector.shape_cast %196 : vector<32xf32> to vector<1x32xf32>
    %cst_84 = arith.constant dense<0.000000e+00> : vector<1xf32>
    %198 = vector.multi_reduction <add>, %182, %cst_84 [0] : vector<16x1xf32> to vector<1xf32>
    %199 = vector.shape_cast %198 : vector<1xf32> to vector<1x1xf32>
    %200 = vector.broadcast %182 : vector<16x1xf32> to vector<16x32xf32>
    %201 = arith.mulf %189, %200 : vector<16x32xf32>
    %cst_85 = arith.constant dense<0.000000e+00> : vector<32xf32>
    %202 = vector.multi_reduction <add>, %201, %cst_85 [0] : vector<16x32xf32> to vector<32xf32>
    %203 = vector.shape_cast %202 : vector<32xf32> to vector<1x32xf32>
    %204 = vector.broadcast %199 : vector<1x1xf32> to vector<1x32xf32>
    %205 = arith.divf %203, %204 : vector<1x32xf32>
    %206 = vector.broadcast %182 : vector<16x1xf32> to vector<16x32xf32>
    %207 = arith.mulf %189, %206 : vector<16x32xf32>
    %208 = vector.broadcast %182 : vector<16x1xf32> to vector<16x16xf32>
    %209 = arith.mulf %111, %208 : vector<16x16xf32>
    %210 = vector.broadcast %186 : vector<1x16xf32> to vector<16x16xf32>
    %211 = arith.mulf %209, %210 : vector<16x16xf32>
    %c2 = arith.constant 2 : index
    %c0_86 = arith.constant 0 : index
    %c0_87 = arith.constant 0 : index
    %212 = vector.load %arg4[%c2, %c0_86, %c0_87] : memref<3x32x32xf32, #tpu.memory_space<vmem>>, vector<1x32x32xf32>
    %213 = vector.shape_cast %212 : vector<1x32x32xf32> to vector<32x32xf32>
    %c2_88 = arith.constant 2 : index
    %c0_89 = arith.constant 0 : index
    %c0_90 = arith.constant 0 : index
    %214 = vector.load %arg5[%c2_88, %c0_89, %c0_90] : memref<3x1x32xf32, #tpu.memory_space<vmem>>, vector<1x1x32xf32>
    %215 = vector.shape_cast %214 : vector<1x1x32xf32> to vector<1x32xf32>
    %c2_91 = arith.constant 2 : index
    %c0_92 = arith.constant 0 : index
    %c0_93 = arith.constant 0 : index
    %216 = vector.load %arg6[%c2_91, %c0_92, %c0_93] : memref<3x1x32xf32, #tpu.memory_space<vmem>>, vector<1x1x32xf32>
    %217 = vector.shape_cast %216 : vector<1x1x32xf32> to vector<1x32xf32>
    %c2_94 = arith.constant 2 : index
    %c0_95 = arith.constant 0 : index
    %c0_96 = arith.constant 0 : index
    %218 = vector.load %arg7[%c2_94, %c0_95, %c0_96] : memref<3x1x32xf32, #tpu.memory_space<vmem>>, vector<1x1x32xf32>
    %219 = vector.shape_cast %218 : vector<1x1x32xf32> to vector<1x32xf32>
    %c2_97 = arith.constant 2 : index
    %c0_98 = arith.constant 0 : index
    %c0_99 = arith.constant 0 : index
    %220 = vector.load %arg8[%c2_97, %c0_98, %c0_99] : memref<3x1x1xf32, #tpu.memory_space<vmem>>, vector<1x1x1xf32>
    %221 = vector.shape_cast %220 : vector<1x1x1xf32> to vector<1x1xf32>
    %cst_100 = arith.constant dense<0.000000e+00> : vector<16x32xf32>
    %222 = tpu.matmul %207, %213, %cst_100 {dimension_numbers = #tpu.dot_dimension_numbers<[1], [0], [0], [1], [0, 0, 1, 1], [], []>} : vector<16x32xf32>, vector<32x32xf32>, vector<16x32xf32> -> vector<16x32xf32>
    %223 = vector.broadcast %182 : vector<16x1xf32> to vector<16x16xf32>
    %224 = arith.mulf %11, %223 : vector<16x16xf32>
    %225 = arith.addf %211, %224 : vector<16x16xf32>
    %cst_101 = arith.constant dense<0.000000e+00> : vector<16xf32>
    %226 = vector.multi_reduction <add>, %225, %cst_101 [1] : vector<16x16xf32> to vector<16xf32>
    %227 = vector.shape_cast %226 : vector<16xf32> to vector<16x1xf32>
    %cst_102 = arith.constant 0.000000e+00 : f32
    %228 = vector.broadcast %cst_102 : f32 to vector<16x1xf32>
    %229 = arith.cmpf ogt, %227, %228 : vector<16x1xf32>
    %230 = math.rsqrt %227 : vector<16x1xf32>
    %cst_103 = arith.constant 0.000000e+00 : f32
    %231 = vector.broadcast %cst_103 : f32 to vector<16x1xf32>
    %232 = arith.select %229, %230, %231 : vector<16x1xi1>, vector<16x1xf32>
    %233 = vector.broadcast %232 : vector<16x1xf32> to vector<16x32xf32>
    %234 = arith.mulf %233, %222 : vector<16x32xf32>
    %cst_104 = arith.constant dense<0.000000e+00> : vector<16x32xf32>
    %235 = tpu.matmul %225, %234, %cst_104 {dimension_numbers = #tpu.dot_dimension_numbers<[1], [0], [0], [1], [0, 0, 1, 1], [], []>} : vector<16x16xf32>, vector<16x32xf32>, vector<16x32xf32> -> vector<16x32xf32>
    %236 = vector.broadcast %232 : vector<16x1xf32> to vector<16x32xf32>
    %237 = arith.mulf %236, %235 : vector<16x32xf32>
    %238 = vector.broadcast %215 : vector<1x32xf32> to vector<16x32xf32>
    %239 = arith.addf %237, %238 : vector<16x32xf32>
    %cst_105 = arith.constant 0.000000e+00 : f32
    %240 = vector.broadcast %cst_105 : f32 to vector<16x32xf32>
    %241 = arith.maximumf %239, %240 : vector<16x32xf32>
    %cst_106 = arith.constant dense<0.000000e+00> : vector<16x32xf32>
    %242 = tpu.matmul %211, %241, %cst_106 {dimension_numbers = #tpu.dot_dimension_numbers<[1], [0], [0], [1], [0, 0, 1, 1], [], []>} : vector<16x16xf32>, vector<16x32xf32>, vector<16x32xf32> -> vector<16x32xf32>
    %243 = vector.broadcast %217 : vector<1x32xf32> to vector<16x32xf32>
    %244 = arith.mulf %242, %243 : vector<16x32xf32>
    %cst_107 = arith.constant dense<0.000000e+00> : vector<16xf32>
    %245 = vector.multi_reduction <add>, %244, %cst_107 [1] : vector<16x32xf32> to vector<16xf32>
    %246 = vector.shape_cast %245 : vector<16xf32> to vector<16x1xf32>
    %247 = vector.broadcast %219 : vector<1x32xf32> to vector<16x32xf32>
    %248 = arith.mulf %241, %247 : vector<16x32xf32>
    %cst_108 = arith.constant dense<0.000000e+00> : vector<16xf32>
    %249 = vector.multi_reduction <add>, %248, %cst_108 [1] : vector<16x32xf32> to vector<16xf32>
    %250 = vector.shape_cast %249 : vector<16xf32> to vector<16x1xf32>
    %251 = arith.addf %246, %250 : vector<16x1xf32>
    %252 = vector.broadcast %221 : vector<1x1xf32> to vector<16x1xf32>
    %253 = arith.addf %251, %252 : vector<16x1xf32>
    %254 = vector.broadcast %253 : vector<16x1xf32> to vector<16x16xf32>
    %255 = arith.mulf %11, %254 : vector<16x16xf32>
    %cst_109 = arith.constant dense<0.000000e+00> : vector<16xf32>
    %256 = vector.multi_reduction <add>, %255, %cst_109 [0] : vector<16x16xf32> to vector<16xf32>
    %257 = vector.shape_cast %256 : vector<16xf32> to vector<1x16xf32>
    %258 = vector.broadcast %182 : vector<16x1xf32> to vector<16x16xf32>
    %259 = arith.mulf %11, %258 : vector<16x16xf32>
    %cst_110 = arith.constant dense<0.000000e+00> : vector<16xf32>
    %260 = vector.multi_reduction <add>, %259, %cst_110 [0] : vector<16x16xf32> to vector<16xf32>
    %261 = vector.shape_cast %260 : vector<16xf32> to vector<1x16xf32>
    %cst_111 = arith.constant dense<0.000000e+00> : vector<1xf32>
    %262 = vector.multi_reduction <add>, %182, %cst_111 [0] : vector<16x1xf32> to vector<1xf32>
    %263 = vector.shape_cast %262 : vector<1xf32> to vector<1x1xf32>
    %cst_112 = arith.constant 5.000000e-01 : f32
    %264 = vector.broadcast %cst_112 : f32 to vector<1x1xf32>
    %265 = arith.mulf %264, %263 : vector<1x1xf32>
    %266 = math.ceil %265 : vector<1x1xf32>
    %267 = vector.broadcast %257 : vector<1x16xf32> to vector<16x16xf32>
    %268 = vector.broadcast %253 : vector<16x1xf32> to vector<16x16xf32>
    %269 = arith.cmpf ogt, %267, %268 : vector<16x16xf32>
    %cst_113 = arith.constant 1.000000e+00 : f32
    %cst_114 = arith.constant 0.000000e+00 : f32
    %270 = vector.broadcast %cst_113 : f32 to vector<16x16xf32>
    %271 = vector.broadcast %cst_114 : f32 to vector<16x16xf32>
    %272 = arith.select %269, %270, %271 : vector<16x16xi1>, vector<16x16xf32>
    %273 = vector.broadcast %261 : vector<1x16xf32> to vector<16x16xf32>
    %274 = arith.mulf %272, %273 : vector<16x16xf32>
    %cst_115 = arith.constant dense<0.000000e+00> : vector<16xf32>
    %275 = vector.multi_reduction <add>, %274, %cst_115 [1] : vector<16x16xf32> to vector<16xf32>
    %276 = vector.shape_cast %275 : vector<16xf32> to vector<16x1xf32>
    %277 = vector.broadcast %266 : vector<1x1xf32> to vector<16x1xf32>
    %278 = arith.cmpf olt, %276, %277 : vector<16x1xf32>
    %cst_116 = arith.constant 1.000000e+00 : f32
    %cst_117 = arith.constant 0.000000e+00 : f32
    %279 = vector.broadcast %cst_116 : f32 to vector<16x1xf32>
    %280 = vector.broadcast %cst_117 : f32 to vector<16x1xf32>
    %281 = arith.select %278, %279, %280 : vector<16x1xi1>, vector<16x1xf32>
    %282 = arith.mulf %182, %281 : vector<16x1xf32>
    %283 = math.tanh %253 : vector<16x1xf32>
    %284 = vector.broadcast %283 : vector<16x1xf32> to vector<16x32xf32>
    %285 = arith.mulf %241, %284 : vector<16x32xf32>
    %cst_118 = arith.constant 0.000000e+00 : f32
    %286 = vector.broadcast %cst_118 : f32 to vector<16x1xf32>
    %287 = arith.cmpf ogt, %282, %286 : vector<16x1xf32>
    %cst_119 = arith.constant -1.000000e+30 : f32
    %288 = vector.shape_cast %287 : vector<16x1xi1> to vector<16x1xi1>
    %289 = vector.broadcast %288 : vector<16x1xi1> to vector<16x32xi1>
    %290 = vector.broadcast %cst_119 : f32 to vector<16x32xf32>
    %291 = arith.select %289, %285, %290 : vector<16x32xi1>, vector<16x32xf32>
    %cst_120 = arith.constant dense<0xFF800000> : vector<32xf32>
    %292 = vector.multi_reduction <maximumf>, %291, %cst_120 [0] : vector<16x32xf32> to vector<32xf32>
    %293 = vector.shape_cast %292 : vector<32xf32> to vector<1x32xf32>
    %cst_121 = arith.constant dense<0.000000e+00> : vector<1xf32>
    %294 = vector.multi_reduction <add>, %282, %cst_121 [0] : vector<16x1xf32> to vector<1xf32>
    %295 = vector.shape_cast %294 : vector<1xf32> to vector<1x1xf32>
    %296 = vector.broadcast %282 : vector<16x1xf32> to vector<16x32xf32>
    %297 = arith.mulf %285, %296 : vector<16x32xf32>
    %cst_122 = arith.constant dense<0.000000e+00> : vector<32xf32>
    %298 = vector.multi_reduction <add>, %297, %cst_122 [0] : vector<16x32xf32> to vector<32xf32>
    %299 = vector.shape_cast %298 : vector<32xf32> to vector<1x32xf32>
    %300 = vector.broadcast %295 : vector<1x1xf32> to vector<1x32xf32>
    %301 = arith.divf %299, %300 : vector<1x32xf32>
    %302 = tpu.concatenate %97, %105, %197, %205, %293, %301 in 1 : vector<1x32xf32>, vector<1x32xf32>, vector<1x32xf32>, vector<1x32xf32>, vector<1x32xf32>, vector<1x32xf32> -> vector<1x192xf32>
    %c0_123 = arith.constant 0 : index
    %c0_124 = arith.constant 0 : index
    %c0_125 = arith.constant 0 : index
    %303 = vector.load %arg9[%c0_123, %c0_124, %c0_125] : memref<1x1x192xf32, #tpu.memory_space<vmem>>, vector<1x1x192xf32>
    %304 = vector.shape_cast %303 : vector<1x1x192xf32> to vector<1x192xf32>
    %305 = vector.shape_cast %302 : vector<1x192xf32> to vector<1x1x192xf32>
    tpu.vector_store %arg9[%c0_123, %c0_124, %c0_125], %305 {strides = array<i32>} : memref<1x1x192xf32, #tpu.memory_space<vmem>>, vector<1x1x192xf32>,
    return
  }
  func.func @transform_0(%arg0: i32) -> (i32, i32, i32) {
    %c0_i32 = arith.constant 0 : i32
    %c0_i32_0 = arith.constant 0 : i32
    %c0_i32_1 = arith.constant 0 : i32
    return %arg0, %c0_i32, %c0_i32_0 : i32, i32, i32
  }
  func.func @transform_1(%arg0: i32) -> (i32, i32, i32) {
    %c0_i32 = arith.constant 0 : i32
    %c0_i32_0 = arith.constant 0 : i32
    %c0_i32_1 = arith.constant 0 : i32
    return %arg0, %c0_i32, %c0_i32_0 : i32, i32, i32
  }
  func.func @transform_2(%arg0: i32) -> (i32, i32, i32) {
    %c0_i32 = arith.constant 0 : i32
    %c0_i32_0 = arith.constant 0 : i32
    %c0_i32_1 = arith.constant 0 : i32
    return %arg0, %c0_i32, %c0_i32_0 : i32, i32, i32
  }
  func.func @transform_3(%arg0: i32) -> (i32, i32, i32) {
    %c0_i32 = arith.constant 0 : i32
    %c0_i32_0 = arith.constant 0 : i32
    %c0_i32_1 = arith.constant 0 : i32
    %c0_i32_2 = arith.constant 0 : i32
    return %c0_i32, %c0_i32_0, %c0_i32_1 : i32, i32, i32
  }
  func.func @transform_4(%arg0: i32) -> (i32, i32, i32) {
    %c0_i32 = arith.constant 0 : i32
    %c0_i32_0 = arith.constant 0 : i32
    %c0_i32_1 = arith.constant 0 : i32
    %c0_i32_2 = arith.constant 0 : i32
    return %c0_i32, %c0_i32_0, %c0_i32_1 : i32, i32, i32
  }
  func.func @transform_5(%arg0: i32) -> (i32, i32, i32) {
    %c0_i32 = arith.constant 0 : i32
    %c0_i32_0 = arith.constant 0 : i32
    %c0_i32_1 = arith.constant 0 : i32
    %c0_i32_2 = arith.constant 0 : i32
    return %c0_i32, %c0_i32_0, %c0_i32_1 : i32, i32, i32
  }
  func.func @transform_6(%arg0: i32) -> (i32, i32, i32) {
    %c0_i32 = arith.constant 0 : i32
    %c0_i32_0 = arith.constant 0 : i32
    %c0_i32_1 = arith.constant 0 : i32
    %c0_i32_2 = arith.constant 0 : i32
    return %c0_i32, %c0_i32_0, %c0_i32_1 : i32, i32, i32
  }
  func.func @transform_7(%arg0: i32) -> (i32, i32, i32) {
    %c0_i32 = arith.constant 0 : i32
    %c0_i32_0 = arith.constant 0 : i32
    %c0_i32_1 = arith.constant 0 : i32
    %c0_i32_2 = arith.constant 0 : i32
    return %c0_i32, %c0_i32_0, %c0_i32_1 : i32, i32, i32
  }
  func.func @transform_8(%arg0: i32) -> (i32, i32, i32) {
    %c0_i32 = arith.constant 0 : i32
    %c0_i32_0 = arith.constant 0 : i32
    %c0_i32_1 = arith.constant 0 : i32
    return %arg0, %c0_i32, %c0_i32_0 : i32, i32, i32
  }
}

</mosaic_0001>

<llo_original>
// kernel: forward.3
$region0: #{forward.3}
  #allocation0 [shape = 'u32[]', space=smem, size = 0x4, offset = 0x4, fixed_abs, tag = 'smem constant byte address 0x4 - core index']
  #allocation1 [shape = 'u32[144,128]{1,0:T(1,128)}', space=vmem, size = 0x12000, scoped, tag = 'internal scratch']
  %s0 = inlined_call_operand.vmem [shape: f32[6,192], index: 0, kind: input, shape index: {}]
  %s1 = inlined_call_operand.vmem [shape: f32[6,6], index: 1, kind: input, shape index: {}]
  %s2 = inlined_call_operand.vmem [shape: f32[192,32], index: 2, kind: input, shape index: {}]
  %s3 = inlined_call_operand.vmem [shape: f32[1,32], index: 3, kind: input, shape index: {}]
  %s4 = inlined_call_operand.vmem [shape: f32[32,7], index: 4, kind: input, shape index: {}]
  %s5 = inlined_call_operand.vmem [shape: f32[1,7], index: 5, kind: input, shape index: {}]
  %s6 = inlined_call_operand.hbm [shape: f32[6,7], index: 6, kind: output, shape index: {}]
  %s7 = sld [smem:[#allocation0]]
  $region34: #{forward.3} parent=0
    _
  %s9 = ssub.s32 1, %s7
  %s10 = scalar_select 0, %s9, %s7
  $region1: #{forward.3} parent=0
    #allocation2 [shape = 'u8[4096]{0}', space=vmem, size = 0x1000, scoped, tag = 'output window, operand 0, single buffered']
    #allocation3 [shape = 's32[1]{0}', space=sflag, size = 0x4, scoped, tag = 'scoped memory for forward.3']
    %11 = vsyncpa [#allocation3], 0
    // Predicated region
    $region2: #{forward.3} parent=1 // pred_check
      _
    $region3: #{forward.3} parent=1 // pred_check_branch
      %13 = sbr.rel (0) target = $region5
    $region4: #{forward.3} parent=1 // pred_region
      _
    $region5: #{forward.3} parent=1 // pred_fallthru
      _
    // Predicated region
    $region6: #{forward.3} parent=1 // pred_check
      _
    $region7: #{forward.3} parent=1 // pred_check_branch
      %15 = sbr.rel (0) target = $region9
    $region8: #{forward.3} parent=1 // pred_region
      _
    $region9: #{forward.3} parent=1 // pred_fallthru
      _
    // Predicated region
    $region10: #{forward.3} parent=1 // pred_check
      _
    $region11: #{forward.3} parent=1 // pred_check_branch
      %17 = sbr.rel (0) target = $region13
    $region12: #{forward.3} parent=1 // pred_region
      _
    $region13: #{forward.3} parent=1 // pred_fallthru
      _
    // Predicated region
    $region14: #{forward.3} parent=1 // pred_check
      _
    $region15: #{forward.3} parent=1 // pred_check_branch
      %19 = sbr.rel (0) target = $region17
    $region16: #{forward.3} parent=1 // pred_region
      _
    $region17: #{forward.3} parent=1 // pred_fallthru
      _
    // Predicated region
    $region18: #{forward.3} parent=1 // pred_check
      _
    $region19: #{forward.3} parent=1 // pred_check_branch
      %21 = sbr.rel (0) target = $region21
    $region20: #{forward.3} parent=1 // pred_region
      _
    $region21: #{forward.3} parent=1 // pred_fallthru
      _
    // Predicated region
    $region22: #{forward.3} parent=1 // pred_check
      _
    $region23: #{forward.3} parent=1 // pred_check_branch
      %23 = sbr.rel (0) target = $region25
    $region24: #{forward.3} parent=1 // pred_region
      _
    $region25: #{forward.3} parent=1 // pred_fallthru
      _
    %v24 = vld [vmem:[%s0] sm:$0x3f]
    %v25 = vld [vmem:[%s0 + $0x8] sm:$0x3f]
    %v26 = vld [vmem:[%s1] sm:$0x3f]
    %v27 = vlaneseq
    %v28 = vshrl.u32 %v27, 7
    %v29 = vlaneseq
    %v30 = vand.u32 %v29, 127
    %vm31 = vcmp.eq.s32.totalorder %v28, %v30
    %v32 = vsel %vm31, 1.0, 0.0
    %v33 = vadd.f32 %v26, %v32
    %vm34 = vcmask 46080
    %v35 = vsel %vm34, %v33, 0.0
    %36 = vadd.xlane.f32.xlu0 %v35
    %v37 = vpop.xlane.xlu0 %36
    %vm38 = vcmp.gt.f32.partialorder %v37, 0.0
    %v39 = vrsqrt.pop %v37
    %v40 = vsel %vm38, %v39, 0.0
    %v41 = vld [vmem:[%s2] sm:$0xff]
    %v42 = vld [vmem:[%s2 + $0x8] sm:$0xff]
    %v43 = vld [vmem:[%s2 + $0x10] sm:$0xff]
    %v44 = vld [vmem:[%s2 + $0x18] sm:$0xff]
    %v45 = vld [vmem:[%s2 + $0x20] sm:$0xff]
    %v46 = vld [vmem:[%s2 + $0x28] sm:$0xff]
    %v47 = vld [vmem:[%s2 + $0x30] sm:$0xff]
    %v48 = vld [vmem:[%s2 + $0x38] sm:$0xff]
    %v49 = vld [vmem:[%s2 + $0x40] sm:$0xff]
    %v50 = vld [vmem:[%s2 + $0x48] sm:$0xff]
    %v51 = vld [vmem:[%s2 + $0x50] sm:$0xff]
    %v52 = vld [vmem:[%s2 + $0x58] sm:$0xff]
    %v53 = vld [vmem:[%s2 + $0x60] sm:$0xff]
    %v54 = vld [vmem:[%s2 + $0x68] sm:$0xff]
    %v55 = vld [vmem:[%s2 + $0x70] sm:$0xff]
    %v56 = vld [vmem:[%s2 + $0x78] sm:$0xff]
    %v57 = vld [vmem:[%s2 + $0x80] sm:$0xff]
    %v58 = vld [vmem:[%s2 + $0x88] sm:$0xff]
    %v59 = vld [vmem:[%s2 + $0x90] sm:$0xff]
    %v60 = vld [vmem:[%s2 + $0x98] sm:$0xff]
    %v61 = vld [vmem:[%s2 + $0xa0] sm:$0xff]
    %v62 = vld [vmem:[%s2 + $0xa8] sm:$0xff]
    %v63 = vld [vmem:[%s2 + $0xb0] sm:$0xff]
    %v64 = vld [vmem:[%s2 + $0xb8] sm:$0xff]
    %vm65 = vcmask 523264
    %v67 = vsel %vm65, %v25, 0
    %69 = vmatprep.subr.mxu0 0.0
    %70 = vmatpush1.msra.mxu0 %v41
    %71 = vmatprep.subr.mxu0 0.0
    %72 = vmatpush1.msra.mxu0 %v42
    %73 = vmatprep.subr.mxu0 0.0
    %74 = vmatpush1.msra.mxu0 %v43
    %75 = vmatprep.subr.mxu0 0.0
    %76 = vmatpush1.msra.mxu0 %v44
    %77 = vmatprep.subr.mxu0 0.0
    %78 = vmatpush1.msra.mxu0 %v45
    %79 = vmatprep.subr.mxu0 0.0
    %80 = vmatpush1.msra.mxu0 %v46
    %81 = vmatprep.subr.mxu0 0.0
    %82 = vmatpush1.msra.mxu0 %v47
    %83 = vmatprep.subr.mxu0 0.0
    %84 = vmatpush1.msra.mxu0 %v48
    %85 = vmatprep.subr.mxu0 0.0
    %86 = vmatpush1.msra.mxu0 %v49
    %87 = vmatprep.subr.mxu0 0.0
    %88 = vmatpush1.msra.mxu0 %v50
    %89 = vmatprep.subr.mxu0 0.0
    %90 = vmatpush1.msra.mxu0 %v51
    %91 = vmatprep.subr.mxu0 0.0
    %92 = vmatpush1.msra.mxu0 %v52
    %93 = vmatprep.subr.mxu0 0.0
    %94 = vmatpush1.msra.mxu0 %v53
    %95 = vmatprep.subr.mxu0 0.0
    %96 = vmatpush1.msra.mxu0 %v54
    %97 = vmatprep.subr.mxu0 0.0
    %98 = vmatpush1.msra.mxu0 %v55
    %99 = vmatprep.subr.mxu0 0.0
    %100 = vmatpush1.msra.mxu0 %v56
    %101 = vmatprep.subr.mxu0 0.0
    %102 = vmatpush1.msra.mxu0 %v57
    %103 = vmatprep.subr.mxu0 0.0
    %104 = vmatpush1.msra.mxu0 %v58
    %105 = vmatprep.subr.mxu0 0.0
    %106 = vmatpush1.msra.mxu0 %v59
    %107 = vmatprep.subr.mxu0 0.0
    %108 = vmatpush1.msra.mxu0 %v60
    %109 = vmatprep.subr.mxu0 0.0
    %110 = vmatpush1.msra.mxu0 %v61
    %111 = vmatprep.subr.mxu0 0.0
    %112 = vmatpush1.msra.mxu0 %v62
    %113 = vmatprep.subr.mxu0 0.0
    %114 = vmatpush1.msra.mxu0 %v63
    %115 = vmatprep.subr.mxu0 0.0
    %116 = vmatpush1.msra.mxu0 %v64
    %117 = vmatprep.subr.mxu0 0.0
    %118 = vmatpush1.msra.mxu0 0.0
    %119 = vmatprep.subr.mxu0 0.0
    %120 = vmatpush1.msra.mxu0 0.0
    %121 = vmatprep.subr.mxu0 0.0
    %122 = vmatpush1.msra.mxu0 0.0
    %123 = vmatprep.subr.mxu0 0.0
    %124 = vmatpush1.msra.mxu0 0.0
    %125 = vmatprep.subr.mxu0 0.0
    %126 = vmatpush1.msra.mxu0 0.0
    %127 = vmatprep.subr.mxu0 0.0
    %128 = vmatpush1.msra.mxu0 0.0
    %129 = vmatprep.subr.mxu0 0.0
    %130 = vmatpush1.msra.mxu0 0.0
    %131 = vmatprep.subr.mxu0 0.0
    %132 = vmatpush1.msra.mxu0 0.0
    %133 = vmatprep.mubr.f32.mxu0 %v67
    %134 = vmatmul.mubr.f32.gmra.mrb[0].mxu0 %v24
    %v135 = vpop.f32.mrb[0].mxu0
    %v136 = vadd.f32 0.0, %v135
    %v137 = vpop.f32.mrb[0].mxu0
    %138 = vdwg.mxu0
    %v139 = vmul.f32 %v40, %v136
    %vm140 = vcmask 48128
    %v142 = vsel %vm140, %v33, 0
    %vm144 = vcmask 1045504
    %v146 = vsel %vm144, %v139, 0
    %148 = vmatprep.subr.mxu0 0.0
    %149 = vmatpush1.msra.mxu0 %v146
    %150 = vmatprep.subr.mxu0 0.0
    %151 = vmatpush1.msra.mxu0 0.0
    %152 = vmatprep.subr.mxu0 0.0
    %153 = vmatpush1.msra.mxu0 0.0
    %154 = vmatprep.subr.mxu0 0.0
    %155 = vmatpush1.msra.mxu0 0.0
    %156 = vmatprep.subr.mxu0 0.0
    %157 = vmatpush1.msra.mxu0 0.0
    %158 = vmatprep.subr.mxu0 0.0
    %159 = vmatpush1.msra.mxu0 0.0
    %160 = vmatprep.subr.mxu0 0.0
    %161 = vmatpush1.msra.mxu0 0.0
    %162 = vmatprep.subr.mxu0 0.0
    %163 = vmatpush1.msra.mxu0 0.0
    %164 = vmatprep.subr.mxu0 0.0
    %165 = vmatpush1.msra.mxu0 0.0
    %166 = vmatprep.subr.mxu0 0.0
    %167 = vmatpush1.msra.mxu0 0.0
    %168 = vmatprep.subr.mxu0 0.0
    %169 = vmatpush1.msra.mxu0 0.0
    %170 = vmatprep.subr.mxu0 0.0
    %171 = vmatpush1.msra.mxu0 0.0
    %172 = vmatprep.subr.mxu0 0.0
    %173 = vmatpush1.msra.mxu0 0.0
    %174 = vmatprep.subr.mxu0 0.0
    %175 = vmatpush1.msra.mxu0 0.0
    %176 = vmatprep.subr.mxu0 0.0
    %177 = vmatpush1.msra.mxu0 0.0
    %178 = vmatprep.subr.mxu0 0.0
    %179 = vmatpush1.msra.mxu0 0.0
    %180 = vmatprep.subr.mxu0 0.0
    %181 = vmatpush1.msra.mxu0 0.0
    %182 = vmatprep.subr.mxu0 0.0
    %183 = vmatpush1.msra.mxu0 0.0
    %184 = vmatprep.subr.mxu0 0.0
    %185 = vmatpush1.msra.mxu0 0.0
    %186 = vmatprep.subr.mxu0 0.0
    %187 = vmatpush1.msra.mxu0 0.0
    %188 = vmatprep.subr.mxu0 0.0
    %189 = vmatpush1.msra.mxu0 0.0
    %190 = vmatprep.subr.mxu0 0.0
    %191 = vmatpush1.msra.mxu0 0.0
    %192 = vmatprep.subr.mxu0 0.0
    %193 = vmatpush1.msra.mxu0 0.0
    %194 = vmatprep.subr.mxu0 0.0
    %195 = vmatpush1.msra.mxu0 0.0
    %196 = vmatprep.subr.mxu0 0.0
    %197 = vmatpush1.msra.mxu0 0.0
    %198 = vmatprep.subr.mxu0 0.0
    %199 = vmatpush1.msra.mxu0 0.0
    %200 = vmatprep.subr.mxu0 0.0
    %201 = vmatpush1.msra.mxu0 0.0
    %202 = vmatprep.subr.mxu0 0.0
    %203 = vmatpush1.msra.mxu0 0.0
    %204 = vmatprep.subr.mxu0 0.0
    %205 = vmatpush1.msra.mxu0 0.0
    %206 = vmatprep.subr.mxu0 0.0
    %207 = vmatpush1.msra.mxu0 0.0
    %208 = vmatprep.subr.mxu0 0.0
    %209 = vmatpush1.msra.mxu0 0.0
    %210 = vmatprep.subr.mxu0 0.0
    %211 = vmatpush1.msra.mxu0 0.0
    %212 = vmatprep.mubr.f32.mxu0 0.0
    %213 = vmatmul.mubr.f32.gmra.mrb[0].mxu0 %v142
    %v214 = vpop.f32.mrb[0].mxu0
    %v215 = vadd.f32 0.0, %v214
    %v216 = vpop.f32.mrb[0].mxu0
    %217 = vdwg.mxu0
    %v218 = vmul.f32 %v40, %v215
    %v219 = vld [vmem:[%s3] sm:$0x1]
    %v221 = vlaneseq
    %v222 = vshrl.u32 %v221, 7
    %v223 = vsub.s32 0, %v222
    %v224 = vrot.slane %v219, %v223
    %v226 = vadd.f32 %v218, %v224
    %v227 = vmax.f32 %v226, 0.0
    %v228 = vld [vmem:[%s4] sm:$0xff]
    %v229 = vld [vmem:[%s4 + $0x8] sm:$0xff]
    %v230 = vld [vmem:[%s4 + $0x10] sm:$0xff]
    %v231 = vld [vmem:[%s4 + $0x18] sm:$0xff]
    %v232 = vld [vmem:[%s5] sm:$0x1]
    %v234 = vlaneseq
    %v235 = vshrl.u32 %v234, 7
    %v236 = vsub.s32 0, %v235
    %v237 = vrot.slane %v232, %v236
    %vm239 = vcmask 261120
    %v241 = vsel %vm239, %v227, 0
    %243 = vmatprep.subr.mxu0 0.0
    %244 = vmatpush1.msra.mxu0 %v228
    %245 = vmatprep.subr.mxu0 0.0
    %246 = vmatpush1.msra.mxu0 %v229
    %247 = vmatprep.subr.mxu0 0.0
    %248 = vmatpush1.msra.mxu0 %v230
    %249 = vmatprep.subr.mxu0 0.0
    %250 = vmatpush1.msra.mxu0 %v231
    %251 = vmatprep.subr.mxu0 0.0
    %252 = vmatpush1.msra.mxu0 0.0
    %253 = vmatprep.subr.mxu0 0.0
    %254 = vmatpush1.msra.mxu0 0.0
    %255 = vmatprep.subr.mxu0 0.0
    %256 = vmatpush1.msra.mxu0 0.0
    %257 = vmatprep.subr.mxu0 0.0
    %258 = vmatpush1.msra.mxu0 0.0
    %259 = vmatprep.subr.mxu0 0.0
    %260 = vmatpush1.msra.mxu0 0.0
    %261 = vmatprep.subr.mxu0 0.0
    %262 = vmatpush1.msra.mxu0 0.0
    %263 = vmatprep.subr.mxu0 0.0
    %264 = vmatpush1.msra.mxu0 0.0
    %265 = vmatprep.subr.mxu0 0.0
    %266 = vmatpush1.msra.mxu0 0.0
    %267 = vmatprep.subr.mxu0 0.0
    %268 = vmatpush1.msra.mxu0 0.0
    %269 = vmatprep.subr.mxu0 0.0
    %270 = vmatpush1.msra.mxu0 0.0
    %271 = vmatprep.subr.mxu0 0.0
    %272 = vmatpush1.msra.mxu0 0.0
    %273 = vmatprep.subr.mxu0 0.0
    %274 = vmatpush1.msra.mxu0 0.0
    %275 = vmatprep.subr.mxu0 0.0
    %276 = vmatpush1.msra.mxu0 0.0
    %277 = vmatprep.subr.mxu0 0.0
    %278 = vmatpush1.msra.mxu0 0.0
    %279 = vmatprep.subr.mxu0 0.0
    %280 = vmatpush1.msra.mxu0 0.0
    %281 = vmatprep.subr.mxu0 0.0
    %282 = vmatpush1.msra.mxu0 0.0
    %283 = vmatprep.subr.mxu0 0.0
    %284 = vmatpush1.msra.mxu0 0.0
    %285 = vmatprep.subr.mxu0 0.0
    %286 = vmatpush1.msra.mxu0 0.0
    %287 = vmatprep.subr.mxu0 0.0
    %288 = vmatpush1.msra.mxu0 0.0
    %289 = vmatprep.subr.mxu0 0.0
    %290 = vmatpush1.msra.mxu0 0.0
    %291 = vmatprep.subr.mxu0 0.0
    %292 = vmatpush1.msra.mxu0 0.0
    %293 = vmatprep.subr.mxu0 0.0
    %294 = vmatpush1.msra.mxu0 0.0
    %295 = vmatprep.subr.mxu0 0.0
    %296 = vmatpush1.msra.mxu0 0.0
    %297 = vmatprep.subr.mxu0 0.0
    %298 = vmatpush1.msra.mxu0 0.0
    %299 = vmatprep.subr.mxu0 0.0
    %300 = vmatpush1.msra.mxu0 0.0
    %301 = vmatprep.subr.mxu0 0.0
    %302 = vmatpush1.msra.mxu0 0.0
    %303 = vmatprep.subr.mxu0 0.0
    %304 = vmatpush1.msra.mxu0 0.0
    %305 = vmatprep.subr.mxu0 0.0
    %306 = vmatpush1.msra.mxu0 0.0
    %307 = vmatprep.mubr.f32.mxu0 0.0
    %308 = vmatmul.mubr.f32.gmra.mrb[0].mxu0 %v241
    %v309 = vpop.f32.mrb[0].mxu0
    %v310 = vadd.f32 %v237, %v309
    %v311 = vpop.f32.mrb[0].mxu0
    %312 = vdwg.mxu0
    %vm313 = vcmask 54272
    %v314 = vsel %vm313, %v310, -inf
    %315 = vmax.xlane.f32.xlu0 %v314
    %v316 = vpop.xlane.xlu0 %315
    %v317 = vsub.f32 %v310, %v316
    %v318 = vmul.f32 %v317, 1.442695
    %v319 = vpow.pop %v318
    %v320 = vsel %vm313, %v319, 0.0
    %321 = vadd.xlane.f32.xlu0 %v320
    %v322 = vpop.xlane.xlu0 %321
    %v323 = vlog2.pop %v322
    %v324 = vmul.f32 %v323, 0.6931472
    %v325 = vsub.f32 %v317, %v324
    %326 = vst.msk [vmem:[#allocation2] sm:$0x3f] %vm313, %v325
    // Predicated region
    $region26: #{forward.3} parent=1 // pred_check
      _
    $region27: #{forward.3} parent=1 // pred_check_branch
      %328 = sbr.rel (0) target = $region29
    $region28: #{forward.3} parent=1 // pred_region
      %s330 = ssub.s32 128, 128
      %331 = vsyncadd [#allocation3], %s330
      %s333 = sshll.u32 [#allocation2], 4
      %s334 = int_to_ptr.vmem [resolvable:$true] %s333
      %336 = dma.vmem_to_hbm [thread:$0]  %s334, 128, %s6, [#allocation3]
    $region29: #{forward.3} parent=1 // pred_fallthru
      _
    // Predicated region
    $region30: #{forward.3} parent=1 // pred_check
      _
    $region31: #{forward.3} parent=1 // pred_check_branch
      %338 = sbr.rel (0) target = $region33
    $region32: #{forward.3} parent=1 // pred_region
      %339 = dma.done [#allocation3], 128
    $region33: #{forward.3} parent=1 // pred_fallthru
      _
    %340 = vsyncpa [#allocation3], 1

// kernel: forward.2
$region0: #{forward.2}
  #allocation0 [shape = 'u32[]', space=smem, size = 0x4, offset = 0x4, fixed_abs, tag = 'smem constant byte address 0x4 - core index']
  #allocation1 [shape = 'u32[144,128]{1,0:T(1,128)}', space=vmem, size = 0x12000, scoped, tag = 'internal scratch']
  %s0 = inlined_call_operand.vmem [shape: f32[6,16,32], index: 0, kind: input, shape index: {}]
  %s1 = inlined_call_operand.vmem [shape: f32[6,16,16], index: 1, kind: input, shape index: {}]
  %s2 = inlined_call_operand.vmem [shape: f32[6,16,1], index: 2, kind: input, shape index: {}]
  %s3 = inlined_call_operand.hbm [shape: f32[3,32,32], index: 3, kind: input, shape index: {}]
  %s4 = inlined_call_operand.vmem [shape: f32[3,1,32], index: 4, kind: input, shape index: {}]
  %s5 = inlined_call_operand.vmem [shape: f32[3,1,32], index: 5, kind: input, shape index: {}]
  %s6 = inlined_call_operand.vmem [shape: f32[3,1,32], index: 6, kind: input, shape index: {}]
  %s7 = inlined_call_operand.vmem [shape: f32[3,1,1], index: 7, kind: input, shape index: {}]
  %s8 = inlined_call_operand.vmem [shape: f32[6,1,192], index: 8, kind: output, shape index: {}]
  %s9 = sld [smem:[#allocation0]]
  $region69: #{forward.2} parent=0
    _
  %s11 = ssub.s32 1, %s9
  %s12 = scalar_select 0, %s11, %s9
  $region1: #{forward.2} parent=0
    #allocation2 [shape = 'u8[49152]{0}', space=vmem, size = 0xc000, scoped, tag = 'input window, operand 3, single buffered']
    #allocation3 [shape = 's32[2]{0}', space=sflag, size = 0x8, scoped, tag = 'scoped memory for forward.2']
    %13 = vsyncpa [#allocation3], 0
    loop: start=0, step=1, limit=8
    $region2: #{forward.2} parent=1 // loop_pre_header
      _
    $region3: #{forward.2} parent=1 // loop_header
      %s15 = sphi 0, %s19
      %p16 = scmp.ge.s32.totalorder %s15, 8
      %s25 = sphi 0, %s27
      %s28 = sphi 0, %s25
      %s29 = sphi 0, %s28
      %s45 = sphi 0, %s29
      %s51 = sphi 0, %s53
      %s54 = sphi 0, %s51
      %s55 = sphi 0, %s54
      %s71 = sphi 0, %s55
      %s77 = sphi 0, %s79
      %s80 = sphi 0, %s77
      %s81 = sphi 0, %s80
      %s97 = sphi 0, %s81
      %s101 = sphi 0, %s101
      %s103 = sphi 0, %s101
      %s104 = sphi 0, %s103
      %s118 = sphi 0, %s104
      %s122 = sphi 0, %s122
      %s124 = sphi 0, %s122
      %s125 = sphi 0, %s124
      %s139 = sphi 0, %s125
      %s143 = sphi 0, %s143
      %s145 = sphi 0, %s143
      %s146 = sphi 0, %s145
      %s160 = sphi 0, %s146
      %s164 = sphi 0, %s164
      %s166 = sphi 0, %s164
      %s167 = sphi 0, %s166
      %s181 = sphi 0, %s167
      %s185 = sphi 0, %s185
      %s187 = sphi 0, %s185
      %s188 = sphi 0, %s187
      %s202 = sphi 0, %s188
      %s208 = sphi 0, %s210
      %s211 = sphi 0, %s208
      %s212 = sphi 0, %s211
      %s228 = sphi 0, %s212
    $region4: #{forward.2} parent=1 // loop_header_branch
      %18 = sbr.rel (%p16) target = $region8
    $region5: #{forward.2} parent=1 // loop_body
      %s20 = ssub.s32 %s15, 1
      %s21 = ssub.s32 %s15, 2
      %s22 = sadd.s32 %s15, 1
      %s23 = ssub.s32 %s15, %s22
      %p24 = scmp.eq.s32.totalorder %s23, 0
      %s26 = sadd.s32 %s25, 1
      %s27 = scalar_select %p24, %s25, %s26
      %p30 = pneg %p24
      %p31 = scmp.eq.s32.totalorder %s15, 5
      %p32 = por %p30, %p31
      %p33 = scmp.ne.s32.totalorder %s25, %s28
      %p34 = scmp.eq.s32.totalorder %s15, 0
      %p35 = por %p33, %p34
      %p36 = scmp.ne.s32.totalorder %s25, %s28
      %p37 = scmp.eq.s32.totalorder %s20, 5
      %p38 = por %p36, %p37
      %p39 = scmp.ne.s32.totalorder %s28, %s29
      %p40 = scmp.eq.s32.totalorder %s20, 0
      %p41 = por %p39, %p40
      %p42 = scmp.ne.s32.totalorder %s28, %s29
      %p43 = scmp.eq.s32.totalorder %s21, 5
      %p44 = por %p42, %p43
      %p46 = scmp.ne.s32.totalorder %s29, %s45
      %p47 = scmp.eq.s32.totalorder %s21, 0
      %p48 = por %p46, %p47
      %s49 = ssub.s32 %s15, %s22
      %p50 = scmp.eq.s32.totalorder %s49, 0
      %s52 = sadd.s32 %s51, 1
      %s53 = scalar_select %p50, %s51, %s52
      %p56 = pneg %p50
      %p57 = scmp.eq.s32.totalorder %s15, 5
      %p58 = por %p56, %p57
      %p59 = scmp.ne.s32.totalorder %s51, %s54
      %p60 = scmp.eq.s32.totalorder %s15, 0
      %p61 = por %p59, %p60
      %p62 = scmp.ne.s32.totalorder %s51, %s54
      %p63 = scmp.eq.s32.totalorder %s20, 5
      %p64 = por %p62, %p63
      %p65 = scmp.ne.s32.totalorder %s54, %s55
      %p66 = scmp.eq.s32.totalorder %s20, 0
      %p67 = por %p65, %p66
      %p68 = scmp.ne.s32.totalorder %s54, %s55
      %p69 = scmp.eq.s32.totalorder %s21, 5
      %p70 = por %p68, %p69
      %p72 = scmp.ne.s32.totalorder %s55, %s71
      %p73 = scmp.eq.s32.totalorder %s21, 0
      %p74 = por %p72, %p73
      %s75 = ssub.s32 %s15, %s22
      %p76 = scmp.eq.s32.totalorder %s75, 0
      %s78 = sadd.s32 %s77, 1
      %s79 = scalar_select %p76, %s77, %s78
      %p82 = pneg %p76
      %p83 = scmp.eq.s32.totalorder %s15, 5
      %p84 = por %p82, %p83
      %p85 = scmp.ne.s32.totalorder %s77, %s80
      %p86 = scmp.eq.s32.totalorder %s15, 0
      %p87 = por %p85, %p86
      %p88 = scmp.ne.s32.totalorder %s77, %s80
      %p89 = scmp.eq.s32.totalorder %s20, 5
      %p90 = por %p88, %p89
      %p91 = scmp.ne.s32.totalorder %s80, %s81
      %p92 = scmp.eq.s32.totalorder %s20, 0
      %p93 = por %p91, %p92
      %p94 = scmp.ne.s32.totalorder %s80, %s81
      %p95 = scmp.eq.s32.totalorder %s21, 5
      %p96 = por %p94, %p95
      %p98 = scmp.ne.s32.totalorder %s81, %s97
      %p99 = scmp.eq.s32.totalorder %s21, 0
      %p100 = por %p98, %p99
      %s102 = sadd.s32 %s101, 1
      %p105 = scmp.eq.s32.totalorder %s15, 5
      %p106 = scmp.ne.s32.totalorder %s101, %s103
      %p107 = scmp.eq.s32.totalorder %s15, 0
      %p108 = por %p106, %p107
      %p109 = scmp.ne.s32.totalorder %s101, %s103
      %p110 = scmp.eq.s32.totalorder %s20, 5
      %p111 = por %p109, %p110
      %p112 = scmp.ne.s32.totalorder %s103, %s104
      %p113 = scmp.eq.s32.totalorder %s20, 0
      %p114 = por %p112, %p113
      %p115 = scmp.ne.s32.totalorder %s103, %s104
      %p116 = scmp.eq.s32.totalorder %s21, 5
      %p117 = por %p115, %p116
      %p119 = scmp.ne.s32.totalorder %s104, %s118
      %p120 = scmp.eq.s32.totalorder %s21, 0
      %p121 = por %p119, %p120
      %s123 = sadd.s32 %s122, 1
      %p126 = scmp.eq.s32.totalorder %s15, 5
      %p127 = scmp.ne.s32.totalorder %s122, %s124
      %p128 = scmp.eq.s32.totalorder %s15, 0
      %p129 = por %p127, %p128
      %p130 = scmp.ne.s32.totalorder %s122, %s124
      %p131 = scmp.eq.s32.totalorder %s20, 5
      %p132 = por %p130, %p131
      %p133 = scmp.ne.s32.totalorder %s124, %s125
      %p134 = scmp.eq.s32.totalorder %s20, 0
      %p135 = por %p133, %p134
      %p136 = scmp.ne.s32.totalorder %s124, %s125
      %p137 = scmp.eq.s32.totalorder %s21, 5
      %p138 = por %p136, %p137
      %p140 = scmp.ne.s32.totalorder %s125, %s139
      %p141 = scmp.eq.s32.totalorder %s21, 0
      %p142 = por %p140, %p141
      %s144 = sadd.s32 %s143, 1
      %p147 = scmp.eq.s32.totalorder %s15, 5
      %p148 = scmp.ne.s32.totalorder %s143, %s145
      %p149 = scmp.eq.s32.totalorder %s15, 0
      %p150 = por %p148, %p149
      %p151 = scmp.ne.s32.totalorder %s143, %s145
      %p152 = scmp.eq.s32.totalorder %s20, 5
      %p153 = por %p151, %p152
      %p154 = scmp.ne.s32.totalorder %s145, %s146
      %p155 = scmp.eq.s32.totalorder %s20, 0
      %p156 = por %p154, %p155
      %p157 = scmp.ne.s32.totalorder %s145, %s146
      %p158 = scmp.eq.s32.totalorder %s21, 5
      %p159 = por %p157, %p158
      %p161 = scmp.ne.s32.totalorder %s146, %s160
      %p162 = scmp.eq.s32.totalorder %s21, 0
      %p163 = por %p161, %p162
      %s165 = sadd.s32 %s164, 1
      %p168 = scmp.eq.s32.totalorder %s15, 5
      %p169 = scmp.ne.s32.totalorder %s164, %s166
      %p170 = scmp.eq.s32.totalorder %s15, 0
      %p171 = por %p169, %p170
      %p172 = scmp.ne.s32.totalorder %s164, %s166
      %p173 = scmp.eq.s32.totalorder %s20, 5
      %p174 = por %p172, %p173
      %p175 = scmp.ne.s32.totalorder %s166, %s167
      %p176 = scmp.eq.s32.totalorder %s20, 0
      %p177 = por %p175, %p176
      %p178 = scmp.ne.s32.totalorder %s166, %s167
      %p179 = scmp.eq.s32.totalorder %s21, 5
      %p180 = por %p178, %p179
      %p182 = scmp.ne.s32.totalorder %s167, %s181
      %p183 = scmp.eq.s32.totalorder %s21, 0
      %p184 = por %p182, %p183
      %s186 = sadd.s32 %s185, 1
      %p189 = scmp.eq.s32.totalorder %s15, 5
      %p190 = scmp.ne.s32.totalorder %s185, %s187
      %p191 = scmp.eq.s32.totalorder %s15, 0
      %p192 = por %p190, %p191
      %p193 = scmp.ne.s32.totalorder %s185, %s187
      %p194 = scmp.eq.s32.totalorder %s20, 5
      %p195 = por %p193, %p194
      %p196 = scmp.ne.s32.totalorder %s187, %s188
      %p197 = scmp.eq.s32.totalorder %s20, 0
      %p198 = por %p196, %p197
      %p199 = scmp.ne.s32.totalorder %s187, %s188
      %p200 = scmp.eq.s32.totalorder %s21, 5
      %p201 = por %p199, %p200
      %p203 = scmp.ne.s32.totalorder %s188, %s202
      %p204 = scmp.eq.s32.totalorder %s21, 0
      %p205 = por %p203, %p204
      %s206 = ssub.s32 %s15, %s22
      %p207 = scmp.eq.s32.totalorder %s206, 0
      %s209 = sadd.s32 %s208, 1
      %s210 = scalar_select %p207, %s208, %s209
      %p213 = pneg %p207
      %p214 = scmp.eq.s32.totalorder %s15, 5
      %p215 = por %p213, %p214
      %p216 = scmp.ne.s32.totalorder %s208, %s211
      %p217 = scmp.eq.s32.totalorder %s15, 0
      %p218 = por %p216, %p217
      %p219 = scmp.ne.s32.totalorder %s208, %s211
      %p220 = scmp.eq.s32.totalorder %s20, 5
      %p221 = por %p219, %p220
      %p222 = scmp.ne.s32.totalorder %s211, %s212
      %p223 = scmp.eq.s32.totalorder %s20, 0
      %p224 = por %p222, %p223
      %p225 = scmp.ne.s32.totalorder %s211, %s212
      %p226 = scmp.eq.s32.totalorder %s21, 5
      %p227 = por %p225, %p226
      %p229 = scmp.ne.s32.totalorder %s212, %s228
      %p230 = scmp.eq.s32.totalorder %s21, 0
      %p231 = por %p229, %p230
      %p232 = scmp.le.s32.totalorder 1, %s15
      %p233 = scmp.lt.s32.totalorder %s15, 7
      %p234 = pnand %p232, %p233
      %p235 = pneg %p234
      // Predicated region
      $region9: #{forward.2} parent=5 // pred_check
        _
      $region10: #{forward.2} parent=5 // pred_check_branch
        %237 = sbr.rel (%p234) target = $region12
      $region11: #{forward.2} parent=5 // pred_region
        %s238 = ssub.s32 %s15, 1
        // Predicated region
        $region13: #{forward.2} parent=11 // pred_check
          %p239 = pneg %p114
        $region14: #{forward.2} parent=11 // pred_check_branch
          %241 = sbr.rel (%p239) target = $region16
        $region15: #{forward.2} parent=11 // pred_region
          %s243 = ssub.s32 1536, 1536
          %244 = vsyncadd [#allocation3], %s243
          %s245 = sshll.u32 [#allocation2], 4
          %s246 = int_to_ptr.vmem [resolvable:$true] %s245
          %251 = dma.hbm_to_vmem [thread:$0]  %s3, 1536, %s246, [#allocation3], 128, 128, 8
        $region16: #{forward.2} parent=11 // pred_fallthru
          _
        // Predicated region
        $region17: #{forward.2} parent=11 // pred_check
          %p252 = pneg %p135
        $region18: #{forward.2} parent=11 // pred_check_branch
          %254 = sbr.rel (%p252) target = $region20
        $region19: #{forward.2} parent=11 // pred_region
          _
        $region20: #{forward.2} parent=11 // pred_fallthru
          _
        // Predicated region
        $region21: #{forward.2} parent=11 // pred_check
          %p255 = pneg %p156
        $region22: #{forward.2} parent=11 // pred_check_branch
          %257 = sbr.rel (%p255) target = $region24
        $region23: #{forward.2} parent=11 // pred_region
          _
        $region24: #{forward.2} parent=11 // pred_fallthru
          _
        // Predicated region
        $region25: #{forward.2} parent=11 // pred_check
          %p258 = pneg %p177
        $region26: #{forward.2} parent=11 // pred_check_branch
          %260 = sbr.rel (%p258) target = $region28
        $region27: #{forward.2} parent=11 // pred_region
          _
        $region28: #{forward.2} parent=11 // pred_fallthru
          _
        // Predicated region
        $region29: #{forward.2} parent=11 // pred_check
          %p261 = pneg %p198
        $region30: #{forward.2} parent=11 // pred_check_branch
          %263 = sbr.rel (%p261) target = $region32
        $region31: #{forward.2} parent=11 // pred_region
          _
        $region32: #{forward.2} parent=11 // pred_fallthru
          _
      $region12: #{forward.2} parent=5 // pred_fallthru
        _
      %p264 = scmp.lt.s32.totalorder %s15, 6
      // Predicated region
      $region33: #{forward.2} parent=5 // pred_check
        %p265 = pneg %p264
      $region34: #{forward.2} parent=5 // pred_check_branch
        %267 = sbr.rel (%p265) target = $region36
      $region35: #{forward.2} parent=5 // pred_region
        // Predicated region
        $region37: #{forward.2} parent=35 // pred_check
          %p268 = pneg %p35
        $region38: #{forward.2} parent=35 // pred_check_branch
          %270 = sbr.rel (%p268) target = $region40
        $region39: #{forward.2} parent=35 // pred_region
          %p271 = scmp.lt.s32.totalorder %s15, 5
          %s272 = scalar_select %p271, %s15, 5
          %s273 = smul.addr %s272, 2
          %s274 = smul.addr %s273, 8
          %s275 = scalar_lea.vmem %s0, %s274
        $region40: #{forward.2} parent=35 // pred_fallthru
          _
        // Predicated region
        $region41: #{forward.2} parent=35 // pred_check
          %p276 = pneg %p61
        $region42: #{forward.2} parent=35 // pred_check_branch
          %278 = sbr.rel (%p276) target = $region44
        $region43: #{forward.2} parent=35 // pred_region
          %p279 = scmp.lt.s32.totalorder %s15, 5
          %s280 = scalar_select %p279, %s15, 5
          %s281 = smul.addr %s280, 2
          %s282 = smul.addr %s281, 8
          %s283 = scalar_lea.vmem %s1, %s282
        $region44: #{forward.2} parent=35 // pred_fallthru
          _
        // Predicated region
        $region45: #{forward.2} parent=35 // pred_check
          %p284 = pneg %p87
        $region46: #{forward.2} parent=35 // pred_check_branch
          %286 = sbr.rel (%p284) target = $region48
        $region47: #{forward.2} parent=35 // pred_region
          %p287 = scmp.lt.s32.totalorder %s15, 5
          %s288 = scalar_select %p287, %s15, 5
          %s289 = smul.addr %s288, 2
          %s290 = smul.addr %s289, 8
          %s291 = scalar_lea.vmem %s2, %s290
        $region48: #{forward.2} parent=35 // pred_fallthru
          _
      $region36: #{forward.2} parent=5 // pred_fallthru
        _
      %p292 = scmp.le.s32.totalorder 1, %s15
      %p293 = scmp.lt.s32.totalorder %s15, 7
      %p294 = pnand %p292, %p293
      %p295 = pneg %p294
      // Predicated region
      $region49: #{forward.2} parent=5 // pred_check
        _
      $region50: #{forward.2} parent=5 // pred_check_branch
        %297 = sbr.rel (%p294) target = $region52
      $region51: #{forward.2} parent=5 // pred_region
        %s298 = ssub.s32 %s15, 1
        // Predicated region
        $region53: #{forward.2} parent=51 // pred_check
          %p299 = pneg %p114
        $region54: #{forward.2} parent=51 // pred_check_branch
          %301 = sbr.rel (%p299) target = $region56
        $region55: #{forward.2} parent=51 // pred_region
          %302 = dma.done [#allocation3], 1536
        $region56: #{forward.2} parent=51 // pred_fallthru
          _
        %p303 = scmp.lt.s32.totalorder %s20, 5
        %s304 = scalar_select %p303, %s20, 5
        %s305 = smul.addr %s304, 2
        %s306 = smul.addr %s305, 8
        %s307 = scalar_lea.vmem %s0, %s306
        %p308 = pneg %p41
        %p309 = pneg %p38
        %p310 = scmp.lt.s32.totalorder %s20, 5
        %s311 = scalar_select %p310, %s20, 5
        %s312 = smul.addr %s311, 2
        %s313 = smul.addr %s312, 8
        %s314 = scalar_lea.vmem %s1, %s313
        %p315 = pneg %p67
        %p316 = pneg %p64
        %p317 = scmp.lt.s32.totalorder %s20, 5
        %s318 = scalar_select %p317, %s20, 5
        %s319 = smul.addr %s318, 2
        %s320 = smul.addr %s319, 8
        %s321 = scalar_lea.vmem %s2, %s320
        %p322 = pneg %p93
        %p323 = pneg %p90
        %p324 = pneg %p114
        %p325 = pneg %p111
        %p326 = pneg %p135
        %p327 = pneg %p132
        %p328 = pneg %p156
        %p329 = pneg %p153
        %p330 = pneg %p177
        %p331 = pneg %p174
        %p332 = pneg %p198
        %p333 = pneg %p195
        %p334 = pneg %p224
        %p335 = pneg %p221
        %p336 = scmp.lt.s32.totalorder %s20, 5
        %s337 = scalar_select %p336, %s20, 5
        %s338 = smul.addr %s337, 2
        %s339 = scalar_lea.vmem %s8, %s338
        %p340 = scmp.lt.s32.totalorder %s20, 5
        %s341 = scalar_select %p340, %s20, 5
        %s342 = smul.addr %s341, 2
        %s343 = smul.addr %s342, 8
        %s344 = scalar_lea.vmem %s0, %s343
        %p345 = scmp.lt.s32.totalorder %s20, 5
        %s346 = scalar_select %p345, %s20, 5
        %s347 = smul.addr %s346, 2
        %s348 = smul.addr %s347, 8
        %s349 = scalar_lea.vmem %s1, %s348
        %p350 = scmp.lt.s32.totalorder %s20, 5
        %s351 = scalar_select %p350, %s20, 5
        %s352 = smul.addr %s351, 2
        %s353 = smul.addr %s352, 8
        %s354 = scalar_lea.vmem %s2, %s353
        %p355 = scmp.lt.s32.totalorder %s20, 5
        %s356 = scalar_select %p355, %s20, 5
        %s357 = smul.addr %s356, 2
        %s358 = scalar_lea.vmem %s8, %s357
        %v359 = vld [vmem:[%s344] sm:$0xff]
        %v360 = vld [vmem:[%s344 + $0x8] sm:$0xff]
        %v361 = vld [vmem:[%s349] sm:$0xff]
        %v362 = vld [vmem:[%s349 + $0x8] sm:$0xff]
        %v363 = vld [vmem:[%s354] sm:$0xff]
        %v364 = vld [vmem:[%s354 + $0x8] sm:$0xff]
        %v365 = vlaneseq
        %v366 = vshrl.u32 %v365, 7
        %v367 = vadd.s32 %v366, 8
        %v368 = vlaneseq
        %v369 = vand.u32 %v368, 127
        %vm370 = vcmp.eq.s32.totalorder %v366, %v369
        %vm371 = vcmp.eq.s32.totalorder %v367, %v369
        %v372 = vsel %vm370, 1.0, 0.0
        %v373 = vsel %vm371, 1.0, 0.0
        %v374 = vld [vmem:[#allocation2] sm:$0xff]
        %v375 = vld [vmem:[#allocation2 + $0x8] sm:$0xff]
        %v376 = vld [vmem:[#allocation2 + $0x10] sm:$0xff]
        %v377 = vld [vmem:[#allocation2 + $0x18] sm:$0xff]
        %v378 = vld [vmem:[%s4] sm:$0x1]
        %v379 = vld [vmem:[%s5] sm:$0x1]
        %v380 = vld [vmem:[%s6] sm:$0x1]
        %v381 = vld [vmem:[%s7] sm:$0x1]
        %vm382 = vcmask 261120
        %v384 = vsel %vm382, %v359, 0
        %v387 = vsel %vm382, %v360, 0
        %389 = vmatprep.subr.mxu0 0.0
        %390 = vmatpush1.msra.mxu0 %v374
        %391 = vmatprep.subr.mxu0 0.0
        %392 = vmatpush1.msra.mxu0 %v375
        %393 = vmatprep.subr.mxu0 0.0
        %394 = vmatpush1.msra.mxu0 %v376
        %395 = vmatprep.subr.mxu0 0.0
        %396 = vmatpush1.msra.mxu0 %v377
        %397 = vmatprep.subr.mxu0 0.0
        %398 = vmatpush1.msra.mxu0 0.0
        %399 = vmatprep.subr.mxu0 0.0
        %400 = vmatpush1.msra.mxu0 0.0
        %401 = vmatprep.subr.mxu0 0.0
        %402 = vmatpush1.msra.mxu0 0.0
        %403 = vmatprep.subr.mxu0 0.0
        %404 = vmatpush1.msra.mxu0 0.0
        %405 = vmatprep.subr.mxu0 0.0
        %406 = vmatpush1.msra.mxu0 0.0
        %407 = vmatprep.subr.mxu0 0.0
        %408 = vmatpush1.msra.mxu0 0.0
        %409 = vmatprep.subr.mxu0 0.0
        %410 = vmatpush1.msra.mxu0 0.0
        %411 = vmatprep.subr.mxu0 0.0
        %412 = vmatpush1.msra.mxu0 0.0
        %413 = vmatprep.subr.mxu0 0.0
        %414 = vmatpush1.msra.mxu0 0.0
        %415 = vmatprep.subr.mxu0 0.0
        %416 = vmatpush1.msra.mxu0 0.0
        %417 = vmatprep.subr.mxu0 0.0
        %418 = vmatpush1.msra.mxu0 0.0
        %419 = vmatprep.subr.mxu0 0.0
        %420 = vmatpush1.msra.mxu0 0.0
        %421 = vmatprep.subr.mxu0 0.0
        %422 = vmatpush1.msra.mxu0 0.0
        %423 = vmatprep.subr.mxu0 0.0
        %424 = vmatpush1.msra.mxu0 0.0
        %425 = vmatprep.subr.mxu0 0.0
        %426 = vmatpush1.msra.mxu0 0.0
        %427 = vmatprep.subr.mxu0 0.0
        %428 = vmatpush1.msra.mxu0 0.0
        %429 = vmatprep.subr.mxu0 0.0
        %430 = vmatpush1.msra.mxu0 0.0
        %431 = vmatprep.subr.mxu0 0.0
        %432 = vmatpush1.msra.mxu0 0.0
        %433 = vmatprep.subr.mxu0 0.0
        %434 = vmatpush1.msra.mxu0 0.0
        %435 = vmatprep.subr.mxu0 0.0
        %436 = vmatpush1.msra.mxu0 0.0
        %437 = vmatprep.subr.mxu0 0.0
        %438 = vmatpush1.msra.mxu0 0.0
        %439 = vmatprep.subr.mxu0 0.0
        %440 = vmatpush1.msra.mxu0 0.0
        %441 = vmatprep.subr.mxu0 0.0
        %442 = vmatpush1.msra.mxu0 0.0
        %443 = vmatprep.subr.mxu0 0.0
        %444 = vmatpush1.msra.mxu0 0.0
        %445 = vmatprep.subr.mxu0 0.0
        %446 = vmatpush1.msra.mxu0 0.0
        %447 = vmatprep.subr.mxu0 0.0
        %448 = vmatpush1.msra.mxu0 0.0
        %449 = vmatprep.subr.mxu0 0.0
        %450 = vmatpush1.msra.mxu0 0.0
        %451 = vmatprep.subr.mxu0 0.0
        %452 = vmatpush1.msra.mxu0 0.0
        %453 = vmatprep.mubr.f32.mxu0 0.0
        %454 = vmatmul.mubr.f32.gmra.mrb[0].mxu0 %v384
        %v455 = vpop.f32.mrb[0].mxu0
        %v456 = vadd.f32 0.0, %v455
        %v457 = vpop.f32.mrb[0].mxu0
        %458 = vmatprep.mubr.f32.mxu0 0.0
        %459 = vmatmul.mubr.f32.gmra.mrb[0].mxu0 %v387
        %v460 = vpop.f32.mrb[0].mxu0
        %v461 = vadd.f32 0.0, %v460
        %v462 = vpop.f32.mrb[0].mxu0
        %463 = vdwg.mxu0
        %465 = vset.pattern.permute.xlu0 0
        %466 = vperm.xlu0 %465, %v363
        %v467 = vpop.permute.xlu0 %466
        %470 = vset.pattern.permute.xlu0 0
        %471 = vperm.xlu0 %470, %v364
        %v472 = vpop.permute.xlu0 %471
        %v474 = vmul.f32 %v372, %v467
        %v475 = vmul.f32 %v373, %v472
        %v476 = vadd.f32 %v361, %v474
        %v477 = vadd.f32 %v362, %v475
        %vm478 = vcmask 130048
        %v479 = vsel %vm478, %v476, 0.0
        %480 = vadd.xlane.f32.xlu0 %v479
        %v481 = vpop.xlane.xlu0 %480
        %v482 = vsel %vm478, %v477, 0.0
        %483 = vadd.xlane.f32.xlu0 %v482
        %v484 = vpop.xlane.xlu0 %483
        %vm485 = vcmp.gt.f32.partialorder %v481, 0.0
        %vm486 = vcmp.gt.f32.partialorder %v484, 0.0
        %v487 = vrsqrt.pop %v481
        %v488 = vrsqrt.pop %v484
        %v489 = vsel %vm485, %v487, 0.0
        %v490 = vsel %vm486, %v488, 0.0
        %v491 = vmul.f32 %v489, %v456
        %v492 = vmul.f32 %v490, %v461
        %v494 = vsel %vm478, %v476, 0
        %v497 = vsel %vm478, %v477, 0
        %499 = vmatprep.subr.mxu0 0.0
        %500 = vmatpush1.msra.mxu0 %v491
        %501 = vmatprep.subr.mxu0 0.0
        %502 = vmatpush1.msra.mxu0 %v492
        %503 = vmatprep.subr.mxu0 0.0
        %504 = vmatpush1.msra.mxu0 0.0
        %505 = vmatprep.subr.mxu0 0.0
        %506 = vmatpush1.msra.mxu0 0.0
        %507 = vmatprep.subr.mxu0 0.0
        %508 = vmatpush1.msra.mxu0 0.0
        %509 = vmatprep.subr.mxu0 0.0
        %510 = vmatpush1.msra.mxu0 0.0
        %511 = vmatprep.subr.mxu0 0.0
        %512 = vmatpush1.msra.mxu0 0.0
        %513 = vmatprep.subr.mxu0 0.0
        %514 = vmatpush1.msra.mxu0 0.0
        %515 = vmatprep.subr.mxu0 0.0
        %516 = vmatpush1.msra.mxu0 0.0
        %517 = vmatprep.subr.mxu0 0.0
        %518 = vmatpush1.msra.mxu0 0.0
        %519 = vmatprep.subr.mxu0 0.0
        %520 = vmatpush1.msra.mxu0 0.0
        %521 = vmatprep.subr.mxu0 0.0
        %522 = vmatpush1.msra.mxu0 0.0
        %523 = vmatprep.subr.mxu0 0.0
        %524 = vmatpush1.msra.mxu0 0.0
        %525 = vmatprep.subr.mxu0 0.0
        %526 = vmatpush1.msra.mxu0 0.0
        %527 = vmatprep.subr.mxu0 0.0
        %528 = vmatpush1.msra.mxu0 0.0
        %529 = vmatprep.subr.mxu0 0.0
        %530 = vmatpush1.msra.mxu0 0.0
        %531 = vmatprep.subr.mxu0 0.0
        %532 = vmatpush1.msra.mxu0 0.0
        %533 = vmatprep.subr.mxu0 0.0
        %534 = vmatpush1.msra.mxu0 0.0
        %535 = vmatprep.subr.mxu0 0.0
        %536 = vmatpush1.msra.mxu0 0.0
        %537 = vmatprep.subr.mxu0 0.0
        %538 = vmatpush1.msra.mxu0 0.0
        %539 = vmatprep.subr.mxu0 0.0
        %540 = vmatpush1.msra.mxu0 0.0
        %541 = vmatprep.subr.mxu0 0.0
        %542 = vmatpush1.msra.mxu0 0.0
        %543 = vmatprep.subr.mxu0 0.0
        %544 = vmatpush1.msra.mxu0 0.0
        %545 = vmatprep.subr.mxu0 0.0
        %546 = vmatpush1.msra.mxu0 0.0
        %547 = vmatprep.subr.mxu0 0.0
        %548 = vmatpush1.msra.mxu0 0.0
        %549 = vmatprep.subr.mxu0 0.0
        %550 = vmatpush1.msra.mxu0 0.0
        %551 = vmatprep.subr.mxu0 0.0
        %552 = vmatpush1.msra.mxu0 0.0
        %553 = vmatprep.subr.mxu0 0.0
        %554 = vmatpush1.msra.mxu0 0.0
        %555 = vmatprep.subr.mxu0 0.0
        %556 = vmatpush1.msra.mxu0 0.0
        %557 = vmatprep.subr.mxu0 0.0
        %558 = vmatpush1.msra.mxu0 0.0
        %559 = vmatprep.subr.mxu0 0.0
        %560 = vmatpush1.msra.mxu0 0.0
        %561 = vmatprep.subr.mxu0 0.0
        %562 = vmatpush1.msra.mxu0 0.0
        %563 = vmatprep.mubr.f32.mxu0 0.0
        %564 = vmatmul.mubr.f32.gmra.mrb[0].mxu0 %v494
        %v565 = vpop.f32.mrb[0].mxu0
        %v566 = vadd.f32 0.0, %v565
        %v567 = vpop.f32.mrb[0].mxu0
        %568 = vmatprep.mubr.f32.mxu0 0.0
        %569 = vmatmul.mubr.f32.gmra.mrb[0].mxu0 %v497
        %v570 = vpop.f32.mrb[0].mxu0
        %v571 = vadd.f32 0.0, %v570
        %v572 = vpop.f32.mrb[0].mxu0
        %573 = vdwg.mxu0
        %v574 = vmul.f32 %v489, %v566
        %v575 = vmul.f32 %v490, %v571
        %v577 = vlaneseq
        %v578 = vshrl.u32 %v577, 7
        %v579 = vsub.s32 0, %v578
        %v580 = vrot.slane %v378, %v579
        %v582 = vadd.f32 %v574, %v580
        %v583 = vadd.f32 %v575, %v580
        %v584 = vmax.f32 %v582, 0.0
        %v585 = vmax.f32 %v583, 0.0
        %v587 = vsel %vm478, %v361, 0
        %v590 = vsel %vm478, %v362, 0
        %592 = vmatprep.subr.mxu0 0.0
        %593 = vmatpush1.msra.mxu0 %v584
        %594 = vmatprep.subr.mxu0 0.0
        %595 = vmatpush1.msra.mxu0 %v585
        %596 = vmatprep.subr.mxu0 0.0
        %597 = vmatpush1.msra.mxu0 0.0
        %598 = vmatprep.subr.mxu0 0.0
        %599 = vmatpush1.msra.mxu0 0.0
        %600 = vmatprep.subr.mxu0 0.0
        %601 = vmatpush1.msra.mxu0 0.0
        %602 = vmatprep.subr.mxu0 0.0
        %603 = vmatpush1.msra.mxu0 0.0
        %604 = vmatprep.subr.mxu0 0.0
        %605 = vmatpush1.msra.mxu0 0.0
        %606 = vmatprep.subr.mxu0 0.0
        %607 = vmatpush1.msra.mxu0 0.0
        %608 = vmatprep.subr.mxu0 0.0
        %609 = vmatpush1.msra.mxu0 0.0
        %610 = vmatprep.subr.mxu0 0.0
        %611 = vmatpush1.msra.mxu0 0.0
        %612 = vmatprep.subr.mxu0 0.0
        %613 = vmatpush1.msra.mxu0 0.0
        %614 = vmatprep.subr.mxu0 0.0
        %615 = vmatpush1.msra.mxu0 0.0
        %616 = vmatprep.subr.mxu0 0.0
        %617 = vmatpush1.msra.mxu0 0.0
        %618 = vmatprep.subr.mxu0 0.0
        %619 = vmatpush1.msra.mxu0 0.0
        %620 = vmatprep.subr.mxu0 0.0
        %621 = vmatpush1.msra.mxu0 0.0
        %622 = vmatprep.subr.mxu0 0.0
        %623 = vmatpush1.msra.mxu0 0.0
        %624 = vmatprep.subr.mxu0 0.0
        %625 = vmatpush1.msra.mxu0 0.0
        %626 = vmatprep.subr.mxu0 0.0
        %627 = vmatpush1.msra.mxu0 0.0
        %628 = vmatprep.subr.mxu0 0.0
        %629 = vmatpush1.msra.mxu0 0.0
        %630 = vmatprep.subr.mxu0 0.0
        %631 = vmatpush1.msra.mxu0 0.0
        %632 = vmatprep.subr.mxu0 0.0
        %633 = vmatpush1.msra.mxu0 0.0
        %634 = vmatprep.subr.mxu0 0.0
        %635 = vmatpush1.msra.mxu0 0.0
        %636 = vmatprep.subr.mxu0 0.0
        %637 = vmatpush1.msra.mxu0 0.0
        %638 = vmatprep.subr.mxu0 0.0
        %639 = vmatpush1.msra.mxu0 0.0
        %640 = vmatprep.subr.mxu0 0.0
        %641 = vmatpush1.msra.mxu0 0.0
        %642 = vmatprep.subr.mxu0 0.0
        %643 = vmatpush1.msra.mxu0 0.0
        %644 = vmatprep.subr.mxu0 0.0
        %645 = vmatpush1.msra.mxu0 0.0
        %646 = vmatprep.subr.mxu0 0.0
        %647 = vmatpush1.msra.mxu0 0.0
        %648 = vmatprep.subr.mxu0 0.0
        %649 = vmatpush1.msra.mxu0 0.0
        %650 = vmatprep.subr.mxu0 0.0
        %651 = vmatpush1.msra.mxu0 0.0
        %652 = vmatprep.subr.mxu0 0.0
        %653 = vmatpush1.msra.mxu0 0.0
        %654 = vmatprep.subr.mxu0 0.0
        %655 = vmatpush1.msra.mxu0 0.0
        %656 = vmatprep.mubr.f32.mxu0 0.0
        %657 = vmatmul.mubr.f32.gmra.mrb[0].mxu0 %v587
        %v658 = vpop.f32.mrb[0].mxu0
        %v659 = vadd.f32 0.0, %v658
        %v660 = vpop.f32.mrb[0].mxu0
        %661 = vmatprep.mubr.f32.mxu0 0.0
        %662 = vmatmul.mubr.f32.gmra.mrb[0].mxu0 %v590
        %v663 = vpop.f32.mrb[0].mxu0
        %v664 = vadd.f32 0.0, %v663
        %v665 = vpop.f32.mrb[0].mxu0
        %666 = vdwg.mxu0
        %v668 = vlaneseq
        %v669 = vshrl.u32 %v668, 7
        %v670 = vsub.s32 0, %v669
        %v671 = vrot.slane %v379, %v670
        %v673 = vmul.f32 %v659, %v671
        %v674 = vmul.f32 %v664, %v671
        %v675 = vsel %vm382, %v673, 0.0
        %676 = vadd.xlane.f32.xlu0 %v675
        %v677 = vpop.xlane.xlu0 %676
        %v678 = vsel %vm382, %v674, 0.0
        %679 = vadd.xlane.f32.xlu0 %v678
        %v680 = vpop.xlane.xlu0 %679
        %v682 = vlaneseq
        %v683 = vshrl.u32 %v682, 7
        %v684 = vsub.s32 0, %v683
        %v685 = vrot.slane %v380, %v684
        %v687 = vmul.f32 %v584, %v685
        %v688 = vmul.f32 %v585, %v685
        %v689 = vsel %vm382, %v687, 0.0
        %690 = vadd.xlane.f32.xlu0 %v689
        %v691 = vpop.xlane.xlu0 %690
        %v692 = vsel %vm382, %v688, 0.0
        %693 = vadd.xlane.f32.xlu0 %v692
        %v694 = vpop.xlane.xlu0 %693
        %v695 = vadd.f32 %v677, %v691
        %v696 = vadd.f32 %v680, %v694
        %v698 = vlaneseq
        %v699 = vshrl.u32 %v698, 7
        %v700 = vsub.s32 0, %v699
        %v701 = vrot.slane %v381, %v700
        %v703 = vadd.f32 %v695, %v701
        %v704 = vadd.f32 %v696, %v701
        %706 = vset.pattern.permute.xlu0 0
        %707 = vperm.xlu0 %706, %v703
        %v708 = vpop.permute.xlu0 %707
        %711 = vset.pattern.permute.xlu0 0
        %712 = vperm.xlu0 %711, %v704
        %v713 = vpop.permute.xlu0 %712
        %v715 = vmul.f32 %v372, %v708
        %v716 = vmul.f32 %v373, %v713
        %v717 = vsel %vm478, %v715, 0.0
        %v718 = vsel %vm478, %v716, 0.0
        %v719 = vadd.f32 %v717, %v718
        %v720 = vrot.slane %v719, 4
        %v721 = vadd.f32 %v719, %v720
        %v722 = vrot.slane %v721, 2
        %v723 = vadd.f32 %v721, %v722
        %v724 = vrot.slane %v723, 1
        %v725 = vadd.f32 %v723, %v724
        %v726 = vsel %vm478, %v474, 0.0
        %v727 = vsel %vm478, %v475, 0.0
        %v728 = vadd.f32 %v726, %v727
        %v729 = vrot.slane %v728, 4
        %v730 = vadd.f32 %v728, %v729
        %v731 = vrot.slane %v730, 2
        %v732 = vadd.f32 %v730, %v731
        %v733 = vrot.slane %v732, 1
        %v734 = vadd.f32 %v732, %v733
        %vm735 = vcmask 7168
        %v736 = vsel %vm735, %v363, 0.0
        %v737 = vsel %vm735, %v364, 0.0
        %v738 = vadd.f32 %v736, %v737
        %v739 = vrot.slane %v738, 4
        %v740 = vadd.f32 %v738, %v739
        %v741 = vrot.slane %v740, 2
        %v742 = vadd.f32 %v740, %v741
        %v743 = vrot.slane %v742, 1
        %v744 = vadd.f32 %v742, %v743
        %v745 = vmul.f32 %v744, 0.5
        %v746 = vceil.f32 %v745
        %vm747 = vcmp.gt.f32.partialorder %v725, %v708
        %vm748 = vcmp.gt.f32.partialorder %v725, %v713
        %v749 = vsel %vm747, 1.0, 0.0
        %v750 = vsel %vm748, 1.0, 0.0
        %v751 = vmul.f32 %v749, %v734
        %v752 = vmul.f32 %v750, %v734
        %v753 = vsel %vm478, %v751, 0.0
        %754 = vadd.xlane.f32.xlu0 %v753
        %v755 = vpop.xlane.xlu0 %754
        %v756 = vsel %vm478, %v752, 0.0
        %757 = vadd.xlane.f32.xlu0 %v756
        %v758 = vpop.xlane.xlu0 %757
        %vm759 = vcmp.lt.f32.partialorder %v755, %v746
        %vm760 = vcmp.lt.f32.partialorder %v758, %v746
        %v761 = vsel %vm759, 1.0, 0.0
        %v762 = vsel %vm760, 1.0, 0.0
        %v763 = vmul.f32 %v363, %v761
        %v764 = vmul.f32 %v364, %v762
        %766 = vset.pattern.permute.xlu0 0
        %767 = vperm.xlu0 %766, %v763
        %v768 = vpop.permute.xlu0 %767
        %771 = vset.pattern.permute.xlu0 0
        %772 = vperm.xlu0 %771, %v764
        %v773 = vpop.permute.xlu0 %772
        %v775 = vmul.f32 %v372, %v768
        %v776 = vmul.f32 %v373, %v773
        %v777 = vsel %vm478, %v775, 0.0
        %v778 = vsel %vm478, %v776, 0.0
        %v779 = vadd.f32 %v777, %v778
        %v780 = vrot.slane %v779, 4
        %v781 = vadd.f32 %v779, %v780
        %v782 = vrot.slane %v781, 2
        %v783 = vadd.f32 %v781, %v782
        %v784 = vrot.slane %v783, 1
        %v785 = vadd.f32 %v783, %v784
        %v786 = vtanh.pop %v703
        %v787 = vtanh.pop %v704
        %789 = vset.pattern.permute.xlu0 0
        %790 = vperm.xlu0 %789, %v786
        %v791 = vpop.permute.xlu0 %790
        %794 = vset.pattern.permute.xlu0 0
        %795 = vperm.xlu0 %794, %v787
        %v796 = vpop.permute.xlu0 %795
        %v798 = vmul.f32 %v584, %v791
        %v799 = vmul.f32 %v585, %v796
        %vm800 = vcmp.gt.f32.partialorder %v763, 0.0
        %vm801 = vcmp.gt.f32.partialorder %v764, 0.0
        %v802 = vsel %vm800, 1, 0
        %v803 = vsel %vm801, 1, 0
        %804 = vset.pattern.permute.xlu0 0
        %805 = vperm.xlu0 %804, %v802
        %v806 = vpop.permute.xlu0 %805
        %807 = vset.pattern.permute.xlu0 0
        %808 = vperm.xlu0 %807, %v803
        %v809 = vpop.permute.xlu0 %808
        %vm810 = vcmp.eq.s32.totalorder %v806, 1
        %vm811 = vcmp.eq.s32.totalorder %v809, 1
        %v812 = vsel %vm810, %v798, -1e+30
        %v813 = vsel %vm811, %v799, -1e+30
        %v814 = vsel %vm382, %v812, -inf
        %v815 = vsel %vm382, %v813, -inf
        %v816 = vmax.f32 %v814, %v815
        %v817 = vrot.slane %v816, 4
        %v818 = vmax.f32 %v816, %v817
        %v819 = vrot.slane %v818, 2
        %v820 = vmax.f32 %v818, %v819
        %v821 = vrot.slane %v820, 1
        %v822 = vmax.f32 %v820, %v821
        %v823 = vsel %vm735, %v763, 0.0
        %v824 = vsel %vm735, %v764, 0.0
        %v825 = vadd.f32 %v823, %v824
        %v826 = vrot.slane %v825, 4
        %v827 = vadd.f32 %v825, %v826
        %v828 = vrot.slane %v827, 2
        %v829 = vadd.f32 %v827, %v828
        %v830 = vrot.slane %v829, 1
        %v831 = vadd.f32 %v829, %v830
        %v832 = vmul.f32 %v798, %v768
        %v833 = vmul.f32 %v799, %v773
        %v834 = vsel %vm382, %v832, 0.0
        %v835 = vsel %vm382, %v833, 0.0
        %v836 = vadd.f32 %v834, %v835
        %v837 = vrot.slane %v836, 4
        %v838 = vadd.f32 %v836, %v837
        %v839 = vrot.slane %v838, 2
        %v840 = vadd.f32 %v838, %v839
        %v841 = vrot.slane %v840, 1
        %v842 = vadd.f32 %v840, %v841
        %844 = vset.pattern.permute.xlu0 0
        %845 = vperm.xlu0 %844, %v831
        %v846 = vpop.permute.xlu0 %845
        %v848 = vrcp.pop %v846
        %v849 = vmul.f32 %v842, %v848
        %v850 = vmul.f32 %v361, %v768
        %v851 = vmul.f32 %v362, %v773
        %v852 = vmul.f32 %v850, %v785
        %v853 = vmul.f32 %v851, %v785
        %s854 = scalar_lea.vmem [#allocation2], 32
        %v855 = vld [vmem:[%s854] sm:$0xff]
        %v856 = vld [vmem:[%s854 + $0x8] sm:$0xff]
        %v857 = vld [vmem:[%s854 + $0x10] sm:$0xff]
        %v858 = vld [vmem:[%s854 + $0x18] sm:$0xff]
        %s859 = scalar_lea.vmem %s4, 1
        %v860 = vld [vmem:[%s859] sm:$0x1]
        %s861 = scalar_lea.vmem %s5, 1
        %v862 = vld [vmem:[%s861] sm:$0x1]
        %s863 = scalar_lea.vmem %s6, 1
        %v864 = vld [vmem:[%s863] sm:$0x1]
        %s865 = scalar_lea.vmem %s7, 1
        %v866 = vld [vmem:[%s865] sm:$0x1]
        %v868 = vsel %vm382, %v832, 0
        %v871 = vsel %vm382, %v833, 0
        %873 = vmatprep.subr.mxu0 0.0
        %874 = vmatpush1.msra.mxu0 %v855
        %875 = vmatprep.subr.mxu0 0.0
        %876 = vmatpush1.msra.mxu0 %v856
        %877 = vmatprep.subr.mxu0 0.0
        %878 = vmatpush1.msra.mxu0 %v857
        %879 = vmatprep.subr.mxu0 0.0
        %880 = vmatpush1.msra.mxu0 %v858
        %881 = vmatprep.subr.mxu0 0.0
        %882 = vmatpush1.msra.mxu0 0.0
        %883 = vmatprep.subr.mxu0 0.0
        %884 = vmatpush1.msra.mxu0 0.0
        %885 = vmatprep.subr.mxu0 0.0
        %886 = vmatpush1.msra.mxu0 0.0
        %887 = vmatprep.subr.mxu0 0.0
        %888 = vmatpush1.msra.mxu0 0.0
        %889 = vmatprep.subr.mxu0 0.0
        %890 = vmatpush1.msra.mxu0 0.0
        %891 = vmatprep.subr.mxu0 0.0
        %892 = vmatpush1.msra.mxu0 0.0
        %893 = vmatprep.subr.mxu0 0.0
        %894 = vmatpush1.msra.mxu0 0.0
        %895 = vmatprep.subr.mxu0 0.0
        %896 = vmatpush1.msra.mxu0 0.0
        %897 = vmatprep.subr.mxu0 0.0
        %898 = vmatpush1.msra.mxu0 0.0
        %899 = vmatprep.subr.mxu0 0.0
        %900 = vmatpush1.msra.mxu0 0.0
        %901 = vmatprep.subr.mxu0 0.0
        %902 = vmatpush1.msra.mxu0 0.0
        %903 = vmatprep.subr.mxu0 0.0
        %904 = vmatpush1.msra.mxu0 0.0
        %905 = vmatprep.subr.mxu0 0.0
        %906 = vmatpush1.msra.mxu0 0.0
        %907 = vmatprep.subr.mxu0 0.0
        %908 = vmatpush1.msra.mxu0 0.0
        %909 = vmatprep.subr.mxu0 0.0
        %910 = vmatpush1.msra.mxu0 0.0
        %911 = vmatprep.subr.mxu0 0.0
        %912 = vmatpush1.msra.mxu0 0.0
        %913 = vmatprep.subr.mxu0 0.0
        %914 = vmatpush1.msra.mxu0 0.0
        %915 = vmatprep.subr.mxu0 0.0
        %916 = vmatpush1.msra.mxu0 0.0
        %917 = vmatprep.subr.mxu0 0.0
        %918 = vmatpush1.msra.mxu0 0.0
        %919 = vmatprep.subr.mxu0 0.0
        %920 = vmatpush1.msra.mxu0 0.0
        %921 = vmatprep.subr.mxu0 0.0
        %922 = vmatpush1.msra.mxu0 0.0
        %923 = vmatprep.subr.mxu0 0.0
        %924 = vmatpush1.msra.mxu0 0.0
        %925 = vmatprep.subr.mxu0 0.0
        %926 = vmatpush1.msra.mxu0 0.0
        %927 = vmatprep.subr.mxu0 0.0
        %928 = vmatpush1.msra.mxu0 0.0
        %929 = vmatprep.subr.mxu0 0.0
        %930 = vmatpush1.msra.mxu0 0.0
        %931 = vmatprep.subr.mxu0 0.0
        %932 = vmatpush1.msra.mxu0 0.0
        %933 = vmatprep.subr.mxu0 0.0
        %934 = vmatpush1.msra.mxu0 0.0
        %935 = vmatprep.subr.mxu0 0.0
        %936 = vmatpush1.msra.mxu0 0.0
        %937 = vmatprep.mubr.f32.mxu0 0.0
        %938 = vmatmul.mubr.f32.gmra.mrb[0].mxu0 %v868
        %v939 = vpop.f32.mrb[0].mxu0
        %v940 = vadd.f32 0.0, %v939
        %v941 = vpop.f32.mrb[0].mxu0
        %942 = vmatprep.mubr.f32.mxu0 0.0
        %943 = vmatmul.mubr.f32.gmra.mrb[0].mxu0 %v871
        %v944 = vpop.f32.mrb[0].mxu0
        %v945 = vadd.f32 0.0, %v944
        %v946 = vpop.f32.mrb[0].mxu0
        %947 = vdwg.mxu0
        %v948 = vadd.f32 %v852, %v775
        %v949 = vadd.f32 %v853, %v776
        %v950 = vsel %vm478, %v948, 0.0
        %951 = vadd.xlane.f32.xlu0 %v950
        %v952 = vpop.xlane.xlu0 %951
        %v953 = vsel %vm478, %v949, 0.0
        %954 = vadd.xlane.f32.xlu0 %v953
        %v955 = vpop.xlane.xlu0 %954
        %vm956 = vcmp.gt.f32.partialorder %v952, 0.0
        %vm957 = vcmp.gt.f32.partialorder %v955, 0.0
        %v958 = vrsqrt.pop %v952
        %v959 = vrsqrt.pop %v955
        %v960 = vsel %vm956, %v958, 0.0
        %v961 = vsel %vm957, %v959, 0.0
        %v962 = vmul.f32 %v960, %v940
        %v963 = vmul.f32 %v961, %v945
        %v965 = vsel %vm478, %v948, 0
        %v968 = vsel %vm478, %v949, 0
        %970 = vmatprep.subr.mxu0 0.0
        %971 = vmatpush1.msra.mxu0 %v962
        %972 = vmatprep.subr.mxu0 0.0
        %973 = vmatpush1.msra.mxu0 %v963
        %974 = vmatprep.subr.mxu0 0.0
        %975 = vmatpush1.msra.mxu0 0.0
        %976 = vmatprep.subr.mxu0 0.0
        %977 = vmatpush1.msra.mxu0 0.0
        %978 = vmatprep.subr.mxu0 0.0
        %979 = vmatpush1.msra.mxu0 0.0
        %980 = vmatprep.subr.mxu0 0.0
        %981 = vmatpush1.msra.mxu0 0.0
        %982 = vmatprep.subr.mxu0 0.0
        %983 = vmatpush1.msra.mxu0 0.0
        %984 = vmatprep.subr.mxu0 0.0
        %985 = vmatpush1.msra.mxu0 0.0
        %986 = vmatprep.subr.mxu0 0.0
        %987 = vmatpush1.msra.mxu0 0.0
        %988 = vmatprep.subr.mxu0 0.0
        %989 = vmatpush1.msra.mxu0 0.0
        %990 = vmatprep.subr.mxu0 0.0
        %991 = vmatpush1.msra.mxu0 0.0
        %992 = vmatprep.subr.mxu0 0.0
        %993 = vmatpush1.msra.mxu0 0.0
        %994 = vmatprep.subr.mxu0 0.0
        %995 = vmatpush1.msra.mxu0 0.0
        %996 = vmatprep.subr.mxu0 0.0
        %997 = vmatpush1.msra.mxu0 0.0
        %998 = vmatprep.subr.mxu0 0.0
        %999 = vmatpush1.msra.mxu0 0.0
        %1000 = vmatprep.subr.mxu0 0.0
        %1001 = vmatpush1.msra.mxu0 0.0
        %1002 = vmatprep.subr.mxu0 0.0
        %1003 = vmatpush1.msra.mxu0 0.0
        %1004 = vmatprep.subr.mxu0 0.0
        %1005 = vmatpush1.msra.mxu0 0.0
        %1006 = vmatprep.subr.mxu0 0.0
        %1007 = vmatpush1.msra.mxu0 0.0
        %1008 = vmatprep.subr.mxu0 0.0
        %1009 = vmatpush1.msra.mxu0 0.0
        %1010 = vmatprep.subr.mxu0 0.0
        %1011 = vmatpush1.msra.mxu0 0.0
        %1012 = vmatprep.subr.mxu0 0.0
        %1013 = vmatpush1.msra.mxu0 0.0
        %1014 = vmatprep.subr.mxu0 0.0
        %1015 = vmatpush1.msra.mxu0 0.0
        %1016 = vmatprep.subr.mxu0 0.0
        %1017 = vmatpush1.msra.mxu0 0.0
        %1018 = vmatprep.subr.mxu0 0.0
        %1019 = vmatpush1.msra.mxu0 0.0
        %1020 = vmatprep.subr.mxu0 0.0
        %1021 = vmatpush1.msra.mxu0 0.0
        %1022 = vmatprep.subr.mxu0 0.0
        %1023 = vmatpush1.msra.mxu0 0.0
        %1024 = vmatprep.subr.mxu0 0.0
        %1025 = vmatpush1.msra.mxu0 0.0
        %1026 = vmatprep.subr.mxu0 0.0
        %1027 = vmatpush1.msra.mxu0 0.0
        %1028 = vmatprep.subr.mxu0 0.0
        %1029 = vmatpush1.msra.mxu0 0.0
        %1030 = vmatprep.subr.mxu0 0.0
        %1031 = vmatpush1.msra.mxu0 0.0
        %1032 = vmatprep.subr.mxu0 0.0
        %1033 = vmatpush1.msra.mxu0 0.0
        %1034 = vmatprep.mubr.f32.mxu0 0.0
        %1035 = vmatmul.mubr.f32.gmra.mrb[0].mxu0 %v965
        %v1036 = vpop.f32.mrb[0].mxu0
        %v1037 = vadd.f32 0.0, %v1036
        %v1038 = vpop.f32.mrb[0].mxu0
        %1039 = vmatprep.mubr.f32.mxu0 0.0
        %1040 = vmatmul.mubr.f32.gmra.mrb[0].mxu0 %v968
        %v1041 = vpop.f32.mrb[0].mxu0
        %v1042 = vadd.f32 0.0, %v1041
        %v1043 = vpop.f32.mrb[0].mxu0
        %1044 = vdwg.mxu0
        %v1045 = vmul.f32 %v960, %v1037
        %v1046 = vmul.f32 %v961, %v1042
        %v1048 = vlaneseq
        %v1049 = vshrl.u32 %v1048, 7
        %v1050 = vsub.s32 0, %v1049
        %v1051 = vrot.slane %v860, %v1050
        %v1053 = vadd.f32 %v1045, %v1051
        %v1054 = vadd.f32 %v1046, %v1051
        %v1055 = vmax.f32 %v1053, 0.0
        %v1056 = vmax.f32 %v1054, 0.0
        %v1058 = vsel %vm478, %v852, 0
        %v1061 = vsel %vm478, %v853, 0
        %1063 = vmatprep.subr.mxu0 0.0
        %1064 = vmatpush1.msra.mxu0 %v1055
        %1065 = vmatprep.subr.mxu0 0.0
        %1066 = vmatpush1.msra.mxu0 %v1056
        %1067 = vmatprep.subr.mxu0 0.0
        %1068 = vmatpush1.msra.mxu0 0.0
        %1069 = vmatprep.subr.mxu0 0.0
        %1070 = vmatpush1.msra.mxu0 0.0
        %1071 = vmatprep.subr.mxu0 0.0
        %1072 = vmatpush1.msra.mxu0 0.0
        %1073 = vmatprep.subr.mxu0 0.0
        %1074 = vmatpush1.msra.mxu0 0.0
        %1075 = vmatprep.subr.mxu0 0.0
        %1076 = vmatpush1.msra.mxu0 0.0
        %1077 = vmatprep.subr.mxu0 0.0
        %1078 = vmatpush1.msra.mxu0 0.0
        %1079 = vmatprep.subr.mxu0 0.0
        %1080 = vmatpush1.msra.mxu0 0.0
        %1081 = vmatprep.subr.mxu0 0.0
        %1082 = vmatpush1.msra.mxu0 0.0
        %1083 = vmatprep.subr.mxu0 0.0
        %1084 = vmatpush1.msra.mxu0 0.0
        %1085 = vmatprep.subr.mxu0 0.0
        %1086 = vmatpush1.msra.mxu0 0.0
        %1087 = vmatprep.subr.mxu0 0.0
        %1088 = vmatpush1.msra.mxu0 0.0
        %1089 = vmatprep.subr.mxu0 0.0
        %1090 = vmatpush1.msra.mxu0 0.0
        %1091 = vmatprep.subr.mxu0 0.0
        %1092 = vmatpush1.msra.mxu0 0.0
        %1093 = vmatprep.subr.mxu0 0.0
        %1094 = vmatpush1.msra.mxu0 0.0
        %1095 = vmatprep.subr.mxu0 0.0
        %1096 = vmatpush1.msra.mxu0 0.0
        %1097 = vmatprep.subr.mxu0 0.0
        %1098 = vmatpush1.msra.mxu0 0.0
        %1099 = vmatprep.subr.mxu0 0.0
        %1100 = vmatpush1.msra.mxu0 0.0
        %1101 = vmatprep.subr.mxu0 0.0
        %1102 = vmatpush1.msra.mxu0 0.0
        %1103 = vmatprep.subr.mxu0 0.0
        %1104 = vmatpush1.msra.mxu0 0.0
        %1105 = vmatprep.subr.mxu0 0.0
        %1106 = vmatpush1.msra.mxu0 0.0
        %1107 = vmatprep.subr.mxu0 0.0
        %1108 = vmatpush1.msra.mxu0 0.0
        %1109 = vmatprep.subr.mxu0 0.0
        %1110 = vmatpush1.msra.mxu0 0.0
        %1111 = vmatprep.subr.mxu0 0.0
        %1112 = vmatpush1.msra.mxu0 0.0
        %1113 = vmatprep.subr.mxu0 0.0
        %1114 = vmatpush1.msra.mxu0 0.0
        %1115 = vmatprep.subr.mxu0 0.0
        %1116 = vmatpush1.msra.mxu0 0.0
        %1117 = vmatprep.subr.mxu0 0.0
        %1118 = vmatpush1.msra.mxu0 0.0
        %1119 = vmatprep.subr.mxu0 0.0
        %1120 = vmatpush1.msra.mxu0 0.0
        %1121 = vmatprep.subr.mxu0 0.0
        %1122 = vmatpush1.msra.mxu0 0.0
        %1123 = vmatprep.subr.mxu0 0.0
        %1124 = vmatpush1.msra.mxu0 0.0
        %1125 = vmatprep.subr.mxu0 0.0
        %1126 = vmatpush1.msra.mxu0 0.0
        %1127 = vmatprep.mubr.f32.mxu0 0.0
        %1128 = vmatmul.mubr.f32.gmra.mrb[0].mxu0 %v1058
        %v1129 = vpop.f32.mrb[0].mxu0
        %v1130 = vadd.f32 0.0, %v1129
        %v1131 = vpop.f32.mrb[0].mxu0
        %1132 = vmatprep.mubr.f32.mxu0 0.0
        %1133 = vmatmul.mubr.f32.gmra.mrb[0].mxu0 %v1061
        %v1134 = vpop.f32.mrb[0].mxu0
        %v1135 = vadd.f32 0.0, %v1134
        %v1136 = vpop.f32.mrb[0].mxu0
        %1137 = vdwg.mxu0
        %v1139 = vlaneseq
        %v1140 = vshrl.u32 %v1139, 7
        %v1141 = vsub.s32 0, %v1140
        %v1142 = vrot.slane %v862, %v1141
        %v1144 = vmul.f32 %v1130, %v1142
        %v1145 = vmul.f32 %v1135, %v1142
        %v1146 = vsel %vm382, %v1144, 0.0
        %1147 = vadd.xlane.f32.xlu0 %v1146
        %v1148 = vpop.xlane.xlu0 %1147
        %v1149 = vsel %vm382, %v1145, 0.0
        %1150 = vadd.xlane.f32.xlu0 %v1149
        %v1151 = vpop.xlane.xlu0 %1150
        %v1153 = vlaneseq
        %v1154 = vshrl.u32 %v1153, 7
        %v1155 = vsub.s32 0, %v1154
        %v1156 = vrot.slane %v864, %v1155
        %v1158 = vmul.f32 %v1055, %v1156
        %v1159 = vmul.f32 %v1056, %v1156
        %v1160 = vsel %vm382, %v1158, 0.0
        %1161 = vadd.xlane.f32.xlu0 %v1160
        %v1162 = vpop.xlane.xlu0 %1161
        %v1163 = vsel %vm382, %v1159, 0.0
        %1164 = vadd.xlane.f32.xlu0 %v1163
        %v1165 = vpop.xlane.xlu0 %1164
        %v1166 = vadd.f32 %v1148, %v1162
        %v1167 = vadd.f32 %v1151, %v1165
        %v1169 = vlaneseq
        %v1170 = vshrl.u32 %v1169, 7
        %v1171 = vsub.s32 0, %v1170
        %v1172 = vrot.slane %v866, %v1171
        %v1174 = vadd.f32 %v1166, %v1172
        %v1175 = vadd.f32 %v1167, %v1172
        %1177 = vset.pattern.permute.xlu0 0
        %1178 = vperm.xlu0 %1177, %v1174
        %v1179 = vpop.permute.xlu0 %1178
        %1182 = vset.pattern.permute.xlu0 0
        %1183 = vperm.xlu0 %1182, %v1175
        %v1184 = vpop.permute.xlu0 %1183
        %v1186 = vmul.f32 %v372, %v1179
        %v1187 = vmul.f32 %v373, %v1184
        %v1188 = vsel %vm478, %v1186, 0.0
        %v1189 = vsel %vm478, %v1187, 0.0
        %v1190 = vadd.f32 %v1188, %v1189
        %v1191 = vrot.slane %v1190, 4
        %v1192 = vadd.f32 %v1190, %v1191
        %v1193 = vrot.slane %v1192, 2
        %v1194 = vadd.f32 %v1192, %v1193
        %v1195 = vrot.slane %v1194, 1
        %v1196 = vadd.f32 %v1194, %v1195
        %v1197 = vmul.f32 %v831, 0.5
        %v1198 = vceil.f32 %v1197
        %vm1199 = vcmp.gt.f32.partialorder %v1196, %v1179
        %vm1200 = vcmp.gt.f32.partialorder %v1196, %v1184
        %v1201 = vsel %vm1199, 1.0, 0.0
        %v1202 = vsel %vm1200, 1.0, 0.0
        %v1203 = vmul.f32 %v1201, %v785
        %v1204 = vmul.f32 %v1202, %v785
        %v1205 = vsel %vm478, %v1203, 0.0
        %1206 = vadd.xlane.f32.xlu0 %v1205
        %v1207 = vpop.xlane.xlu0 %1206
        %v1208 = vsel %vm478, %v1204, 0.0
        %1209 = vadd.xlane.f32.xlu0 %v1208
        %v1210 = vpop.xlane.xlu0 %1209
        %vm1211 = vcmp.lt.f32.partialorder %v1207, %v1198
        %vm1212 = vcmp.lt.f32.partialorder %v1210, %v1198
        %v1213 = vsel %vm1211, 1.0, 0.0
        %v1214 = vsel %vm1212, 1.0, 0.0
        %v1215 = vmul.f32 %v763, %v1213
        %v1216 = vmul.f32 %v764, %v1214
        %1218 = vset.pattern.permute.xlu0 0
        %1219 = vperm.xlu0 %1218, %v1215
        %v1220 = vpop.permute.xlu0 %1219
        %1223 = vset.pattern.permute.xlu0 0
        %1224 = vperm.xlu0 %1223, %v1216
        %v1225 = vpop.permute.xlu0 %1224
        %v1227 = vmul.f32 %v372, %v1220
        %v1228 = vmul.f32 %v373, %v1225
        %v1229 = vsel %vm478, %v1227, 0.0
        %v1230 = vsel %vm478, %v1228, 0.0
        %v1231 = vadd.f32 %v1229, %v1230
        %v1232 = vrot.slane %v1231, 4
        %v1233 = vadd.f32 %v1231, %v1232
        %v1234 = vrot.slane %v1233, 2
        %v1235 = vadd.f32 %v1233, %v1234
        %v1236 = vrot.slane %v1235, 1
        %v1237 = vadd.f32 %v1235, %v1236
        %v1238 = vtanh.pop %v1174
        %v1239 = vtanh.pop %v1175
        %1241 = vset.pattern.permute.xlu0 0
        %1242 = vperm.xlu0 %1241, %v1238
        %v1243 = vpop.permute.xlu0 %1242
        %1246 = vset.pattern.permute.xlu0 0
        %1247 = vperm.xlu0 %1246, %v1239
        %v1248 = vpop.permute.xlu0 %1247
        %v1250 = vmul.f32 %v1055, %v1243
        %v1251 = vmul.f32 %v1056, %v1248
        %vm1252 = vcmp.gt.f32.partialorder %v1215, 0.0
        %vm1253 = vcmp.gt.f32.partialorder %v1216, 0.0
        %v1254 = vsel %vm1252, 1, 0
        %v1255 = vsel %vm1253, 1, 0
        %1256 = vset.pattern.permute.xlu0 0
        %1257 = vperm.xlu0 %1256, %v1254
        %v1258 = vpop.permute.xlu0 %1257
        %1259 = vset.pattern.permute.xlu0 0
        %1260 = vperm.xlu0 %1259, %v1255
        %v1261 = vpop.permute.xlu0 %1260
        %vm1262 = vcmp.eq.s32.totalorder %v1258, 1
        %vm1263 = vcmp.eq.s32.totalorder %v1261, 1
        %v1264 = vsel %vm1262, %v1250, -1e+30
        %v1265 = vsel %vm1263, %v1251, -1e+30
        %v1266 = vsel %vm382, %v1264, -inf
        %v1267 = vsel %vm382, %v1265, -inf
        %v1268 = vmax.f32 %v1266, %v1267
        %v1269 = vrot.slane %v1268, 4
        %v1270 = vmax.f32 %v1268, %v1269
        %v1271 = vrot.slane %v1270, 2
        %v1272 = vmax.f32 %v1270, %v1271
        %v1273 = vrot.slane %v1272, 1
        %v1274 = vmax.f32 %v1272, %v1273
        %v1275 = vsel %vm735, %v1215, 0.0
        %v1276 = vsel %vm735, %v1216, 0.0
        %v1277 = vadd.f32 %v1275, %v1276
        %v1278 = vrot.slane %v1277, 4
        %v1279 = vadd.f32 %v1277, %v1278
        %v1280 = vrot.slane %v1279, 2
        %v1281 = vadd.f32 %v1279, %v1280
        %v1282 = vrot.slane %v1281, 1
        %v1283 = vadd.f32 %v1281, %v1282
        %v1284 = vmul.f32 %v1250, %v1220
        %v1285 = vmul.f32 %v1251, %v1225
        %v1286 = vsel %vm382, %v1284, 0.0
        %v1287 = vsel %vm382, %v1285, 0.0
        %v1288 = vadd.f32 %v1286, %v1287
        %v1289 = vrot.slane %v1288, 4
        %v1290 = vadd.f32 %v1288, %v1289
        %v1291 = vrot.slane %v1290, 2
        %v1292 = vadd.f32 %v1290, %v1291
        %v1293 = vrot.slane %v1292, 1
        %v1294 = vadd.f32 %v1292, %v1293
        %1296 = vset.pattern.permute.xlu0 0
        %1297 = vperm.xlu0 %1296, %v1283
        %v1298 = vpop.permute.xlu0 %1297
        %v1300 = vrcp.pop %v1298
        %v1301 = vmul.f32 %v1294, %v1300
        %v1302 = vmul.f32 %v852, %v1220
        %v1303 = vmul.f32 %v853, %v1225
        %v1304 = vmul.f32 %v1302, %v1237
        %v1305 = vmul.f32 %v1303, %v1237
        %s1306 = scalar_lea.vmem [#allocation2], 64
        %v1307 = vld [vmem:[%s1306] sm:$0xff]
        %v1308 = vld [vmem:[%s1306 + $0x8] sm:$0xff]
        %v1309 = vld [vmem:[%s1306 + $0x10] sm:$0xff]
        %v1310 = vld [vmem:[%s1306 + $0x18] sm:$0xff]
        %s1311 = scalar_lea.vmem %s4, 2
        %v1312 = vld [vmem:[%s1311] sm:$0x1]
        %s1313 = scalar_lea.vmem %s5, 2
        %v1314 = vld [vmem:[%s1313] sm:$0x1]
        %s1315 = scalar_lea.vmem %s6, 2
        %v1316 = vld [vmem:[%s1315] sm:$0x1]
        %s1317 = scalar_lea.vmem %s7, 2
        %v1318 = vld [vmem:[%s1317] sm:$0x1]
        %v1320 = vsel %vm382, %v1284, 0
        %v1323 = vsel %vm382, %v1285, 0
        %1325 = vmatprep.subr.mxu0 0.0
        %1326 = vmatpush1.msra.mxu0 %v1307
        %1327 = vmatprep.subr.mxu0 0.0
        %1328 = vmatpush1.msra.mxu0 %v1308
        %1329 = vmatprep.subr.mxu0 0.0
        %1330 = vmatpush1.msra.mxu0 %v1309
        %1331 = vmatprep.subr.mxu0 0.0
        %1332 = vmatpush1.msra.mxu0 %v1310
        %1333 = vmatprep.subr.mxu0 0.0
        %1334 = vmatpush1.msra.mxu0 0.0
        %1335 = vmatprep.subr.mxu0 0.0
        %1336 = vmatpush1.msra.mxu0 0.0
        %1337 = vmatprep.subr.mxu0 0.0
        %1338 = vmatpush1.msra.mxu0 0.0
        %1339 = vmatprep.subr.mxu0 0.0
        %1340 = vmatpush1.msra.mxu0 0.0
        %1341 = vmatprep.subr.mxu0 0.0
        %1342 = vmatpush1.msra.mxu0 0.0
        %1343 = vmatprep.subr.mxu0 0.0
        %1344 = vmatpush1.msra.mxu0 0.0
        %1345 = vmatprep.subr.mxu0 0.0
        %1346 = vmatpush1.msra.mxu0 0.0
        %1347 = vmatprep.subr.mxu0 0.0
        %1348 = vmatpush1.msra.mxu0 0.0
        %1349 = vmatprep.subr.mxu0 0.0
        %1350 = vmatpush1.msra.mxu0 0.0
        %1351 = vmatprep.subr.mxu0 0.0
        %1352 = vmatpush1.msra.mxu0 0.0
        %1353 = vmatprep.subr.mxu0 0.0
        %1354 = vmatpush1.msra.mxu0 0.0
        %1355 = vmatprep.subr.mxu0 0.0
        %1356 = vmatpush1.msra.mxu0 0.0
        %1357 = vmatprep.subr.mxu0 0.0
        %1358 = vmatpush1.msra.mxu0 0.0
        %1359 = vmatprep.subr.mxu0 0.0
        %1360 = vmatpush1.msra.mxu0 0.0
        %1361 = vmatprep.subr.mxu0 0.0
        %1362 = vmatpush1.msra.mxu0 0.0
        %1363 = vmatprep.subr.mxu0 0.0
        %1364 = vmatpush1.msra.mxu0 0.0
        %1365 = vmatprep.subr.mxu0 0.0
        %1366 = vmatpush1.msra.mxu0 0.0
        %1367 = vmatprep.subr.mxu0 0.0
        %1368 = vmatpush1.msra.mxu0 0.0
        %1369 = vmatprep.subr.mxu0 0.0
        %1370 = vmatpush1.msra.mxu0 0.0
        %1371 = vmatprep.subr.mxu0 0.0
        %1372 = vmatpush1.msra.mxu0 0.0
        %1373 = vmatprep.subr.mxu0 0.0
        %1374 = vmatpush1.msra.mxu0 0.0
        %1375 = vmatprep.subr.mxu0 0.0
        %1376 = vmatpush1.msra.mxu0 0.0
        %1377 = vmatprep.subr.mxu0 0.0
        %1378 = vmatpush1.msra.mxu0 0.0
        %1379 = vmatprep.subr.mxu0 0.0
        %1380 = vmatpush1.msra.mxu0 0.0
        %1381 = vmatprep.subr.mxu0 0.0
        %1382 = vmatpush1.msra.mxu0 0.0
        %1383 = vmatprep.subr.mxu0 0.0
        %1384 = vmatpush1.msra.mxu0 0.0
        %1385 = vmatprep.subr.mxu0 0.0
        %1386 = vmatpush1.msra.mxu0 0.0
        %1387 = vmatprep.subr.mxu0 0.0
        %1388 = vmatpush1.msra.mxu0 0.0
        %1389 = vmatprep.mubr.f32.mxu0 0.0
        %1390 = vmatmul.mubr.f32.gmra.mrb[0].mxu0 %v1320
        %v1391 = vpop.f32.mrb[0].mxu0
        %v1392 = vadd.f32 0.0, %v1391
        %v1393 = vpop.f32.mrb[0].mxu0
        %1394 = vmatprep.mubr.f32.mxu0 0.0
        %1395 = vmatmul.mubr.f32.gmra.mrb[0].mxu0 %v1323
        %v1396 = vpop.f32.mrb[0].mxu0
        %v1397 = vadd.f32 0.0, %v1396
        %v1398 = vpop.f32.mrb[0].mxu0
        %1399 = vdwg.mxu0
        %v1400 = vadd.f32 %v1304, %v1227
        %v1401 = vadd.f32 %v1305, %v1228
        %v1402 = vsel %vm478, %v1400, 0.0
        %1403 = vadd.xlane.f32.xlu0 %v1402
        %v1404 = vpop.xlane.xlu0 %1403
        %v1405 = vsel %vm478, %v1401, 0.0
        %1406 = vadd.xlane.f32.xlu0 %v1405
        %v1407 = vpop.xlane.xlu0 %1406
        %vm1408 = vcmp.gt.f32.partialorder %v1404, 0.0
        %vm1409 = vcmp.gt.f32.partialorder %v1407, 0.0
        %v1410 = vrsqrt.pop %v1404
        %v1411 = vrsqrt.pop %v1407
        %v1412 = vsel %vm1408, %v1410, 0.0
        %v1413 = vsel %vm1409, %v1411, 0.0
        %v1414 = vmul.f32 %v1412, %v1392
        %v1415 = vmul.f32 %v1413, %v1397
        %v1417 = vsel %vm478, %v1400, 0
        %v1420 = vsel %vm478, %v1401, 0
        %1422 = vmatprep.subr.mxu0 0.0
        %1423 = vmatpush1.msra.mxu0 %v1414
        %1424 = vmatprep.subr.mxu0 0.0
        %1425 = vmatpush1.msra.mxu0 %v1415
        %1426 = vmatprep.subr.mxu0 0.0
        %1427 = vmatpush1.msra.mxu0 0.0
        %1428 = vmatprep.subr.mxu0 0.0
        %1429 = vmatpush1.msra.mxu0 0.0
        %1430 = vmatprep.subr.mxu0 0.0
        %1431 = vmatpush1.msra.mxu0 0.0
        %1432 = vmatprep.subr.mxu0 0.0
        %1433 = vmatpush1.msra.mxu0 0.0
        %1434 = vmatprep.subr.mxu0 0.0
        %1435 = vmatpush1.msra.mxu0 0.0
        %1436 = vmatprep.subr.mxu0 0.0
        %1437 = vmatpush1.msra.mxu0 0.0
        %1438 = vmatprep.subr.mxu0 0.0
        %1439 = vmatpush1.msra.mxu0 0.0
        %1440 = vmatprep.subr.mxu0 0.0
        %1441 = vmatpush1.msra.mxu0 0.0
        %1442 = vmatprep.subr.mxu0 0.0
        %1443 = vmatpush1.msra.mxu0 0.0
        %1444 = vmatprep.subr.mxu0 0.0
        %1445 = vmatpush1.msra.mxu0 0.0
        %1446 = vmatprep.subr.mxu0 0.0
        %1447 = vmatpush1.msra.mxu0 0.0
        %1448 = vmatprep.subr.mxu0 0.0
        %1449 = vmatpush1.msra.mxu0 0.0
        %1450 = vmatprep.subr.mxu0 0.0
        %1451 = vmatpush1.msra.mxu0 0.0
        %1452 = vmatprep.subr.mxu0 0.0
        %1453 = vmatpush1.msra.mxu0 0.0
        %1454 = vmatprep.subr.mxu0 0.0
        %1455 = vmatpush1.msra.mxu0 0.0
        %1456 = vmatprep.subr.mxu0 0.0
        %1457 = vmatpush1.msra.mxu0 0.0
        %1458 = vmatprep.subr.mxu0 0.0
        %1459 = vmatpush1.msra.mxu0 0.0
        %1460 = vmatprep.subr.mxu0 0.0
        %1461 = vmatpush1.msra.mxu0 0.0
        %1462 = vmatprep.subr.mxu0 0.0
        %1463 = vmatpush1.msra.mxu0 0.0
        %1464 = vmatprep.subr.mxu0 0.0
        %1465 = vmatpush1.msra.mxu0 0.0
        %1466 = vmatprep.subr.mxu0 0.0
        %1467 = vmatpush1.msra.mxu0 0.0
        %1468 = vmatprep.subr.mxu0 0.0
        %1469 = vmatpush1.msra.mxu0 0.0
        %1470 = vmatprep.subr.mxu0 0.0
        %1471 = vmatpush1.msra.mxu0 0.0
        %1472 = vmatprep.subr.mxu0 0.0
        %1473 = vmatpush1.msra.mxu0 0.0
        %1474 = vmatprep.subr.mxu0 0.0
        %1475 = vmatpush1.msra.mxu0 0.0
        %1476 = vmatprep.subr.mxu0 0.0
        %1477 = vmatpush1.msra.mxu0 0.0
        %1478 = vmatprep.subr.mxu0 0.0
        %1479 = vmatpush1.msra.mxu0 0.0
        %1480 = vmatprep.subr.mxu0 0.0
        %1481 = vmatpush1.msra.mxu0 0.0
        %1482 = vmatprep.subr.mxu0 0.0
        %1483 = vmatpush1.msra.mxu0 0.0
        %1484 = vmatprep.subr.mxu0 0.0
        %1485 = vmatpush1.msra.mxu0 0.0
        %1486 = vmatprep.mubr.f32.mxu0 0.0
        %1487 = vmatmul.mubr.f32.gmra.mrb[0].mxu0 %v1417
        %v1488 = vpop.f32.mrb[0].mxu0
        %v1489 = vadd.f32 0.0, %v1488
        %v1490 = vpop.f32.mrb[0].mxu0
        %1491 = vmatprep.mubr.f32.mxu0 0.0
        %1492 = vmatmul.mubr.f32.gmra.mrb[0].mxu0 %v1420
        %v1493 = vpop.f32.mrb[0].mxu0
        %v1494 = vadd.f32 0.0, %v1493
        %v1495 = vpop.f32.mrb[0].mxu0
        %1496 = vdwg.mxu0
        %v1497 = vmul.f32 %v1412, %v1489
        %v1498 = vmul.f32 %v1413, %v1494
        %v1500 = vlaneseq
        %v1501 = vshrl.u32 %v1500, 7
        %v1502 = vsub.s32 0, %v1501
        %v1503 = vrot.slane %v1312, %v1502
        %v1505 = vadd.f32 %v1497, %v1503
        %v1506 = vadd.f32 %v1498, %v1503
        %v1507 = vmax.f32 %v1505, 0.0
        %v1508 = vmax.f32 %v1506, 0.0
        %v1510 = vsel %vm478, %v1304, 0
        %v1513 = vsel %vm478, %v1305, 0
        %1515 = vmatprep.subr.mxu0 0.0
        %1516 = vmatpush1.msra.mxu0 %v1507
        %1517 = vmatprep.subr.mxu0 0.0
        %1518 = vmatpush1.msra.mxu0 %v1508
        %1519 = vmatprep.subr.mxu0 0.0
        %1520 = vmatpush1.msra.mxu0 0.0
        %1521 = vmatprep.subr.mxu0 0.0
        %1522 = vmatpush1.msra.mxu0 0.0
        %1523 = vmatprep.subr.mxu0 0.0
        %1524 = vmatpush1.msra.mxu0 0.0
        %1525 = vmatprep.subr.mxu0 0.0
        %1526 = vmatpush1.msra.mxu0 0.0
        %1527 = vmatprep.subr.mxu0 0.0
        %1528 = vmatpush1.msra.mxu0 0.0
        %1529 = vmatprep.subr.mxu0 0.0
        %1530 = vmatpush1.msra.mxu0 0.0
        %1531 = vmatprep.subr.mxu0 0.0
        %1532 = vmatpush1.msra.mxu0 0.0
        %1533 = vmatprep.subr.mxu0 0.0
        %1534 = vmatpush1.msra.mxu0 0.0
        %1535 = vmatprep.subr.mxu0 0.0
        %1536 = vmatpush1.msra.mxu0 0.0
        %1537 = vmatprep.subr.mxu0 0.0
        %1538 = vmatpush1.msra.mxu0 0.0
        %1539 = vmatprep.subr.mxu0 0.0
        %1540 = vmatpush1.msra.mxu0 0.0
        %1541 = vmatprep.subr.mxu0 0.0
        %1542 = vmatpush1.msra.mxu0 0.0
        %1543 = vmatprep.subr.mxu0 0.0
        %1544 = vmatpush1.msra.mxu0 0.0
        %1545 = vmatprep.subr.mxu0 0.0
        %1546 = vmatpush1.msra.mxu0 0.0
        %1547 = vmatprep.subr.mxu0 0.0
        %1548 = vmatpush1.msra.mxu0 0.0
        %1549 = vmatprep.subr.mxu0 0.0
        %1550 = vmatpush1.msra.mxu0 0.0
        %1551 = vmatprep.subr.mxu0 0.0
        %1552 = vmatpush1.msra.mxu0 0.0
        %1553 = vmatprep.subr.mxu0 0.0
        %1554 = vmatpush1.msra.mxu0 0.0
        %1555 = vmatprep.subr.mxu0 0.0
        %1556 = vmatpush1.msra.mxu0 0.0
        %1557 = vmatprep.subr.mxu0 0.0
        %1558 = vmatpush1.msra.mxu0 0.0
        %1559 = vmatprep.subr.mxu0 0.0
        %1560 = vmatpush1.msra.mxu0 0.0
        %1561 = vmatprep.subr.mxu0 0.0
        %1562 = vmatpush1.msra.mxu0 0.0
        %1563 = vmatprep.subr.mxu0 0.0
        %1564 = vmatpush1.msra.mxu0 0.0
        %1565 = vmatprep.subr.mxu0 0.0
        %1566 = vmatpush1.msra.mxu0 0.0
        %1567 = vmatprep.subr.mxu0 0.0
        %1568 = vmatpush1.msra.mxu0 0.0
        %1569 = vmatprep.subr.mxu0 0.0
        %1570 = vmatpush1.msra.mxu0 0.0
        %1571 = vmatprep.subr.mxu0 0.0
        %1572 = vmatpush1.msra.mxu0 0.0
        %1573 = vmatprep.subr.mxu0 0.0
        %1574 = vmatpush1.msra.mxu0 0.0
        %1575 = vmatprep.subr.mxu0 0.0
        %1576 = vmatpush1.msra.mxu0 0.0
        %1577 = vmatprep.subr.mxu0 0.0
        %1578 = vmatpush1.msra.mxu0 0.0
        %1579 = vmatprep.mubr.f32.mxu0 0.0
        %1580 = vmatmul.mubr.f32.gmra.mrb[0].mxu0 %v1510
        %v1581 = vpop.f32.mrb[0].mxu0
        %v1582 = vadd.f32 0.0, %v1581
        %v1583 = vpop.f32.mrb[0].mxu0
        %1584 = vmatprep.mubr.f32.mxu0 0.0
        %1585 = vmatmul.mubr.f32.gmra.mrb[0].mxu0 %v1513
        %v1586 = vpop.f32.mrb[0].mxu0
        %v1587 = vadd.f32 0.0, %v1586
        %v1588 = vpop.f32.mrb[0].mxu0
        %1589 = vdwg.mxu0
        %v1591 = vlaneseq
        %v1592 = vshrl.u32 %v1591, 7
        %v1593 = vsub.s32 0, %v1592
        %v1594 = vrot.slane %v1314, %v1593
        %v1596 = vmul.f32 %v1582, %v1594
        %v1597 = vmul.f32 %v1587, %v1594
        %v1598 = vsel %vm382, %v1596, 0.0
        %1599 = vadd.xlane.f32.xlu0 %v1598
        %v1600 = vpop.xlane.xlu0 %1599
        %v1601 = vsel %vm382, %v1597, 0.0
        %1602 = vadd.xlane.f32.xlu0 %v1601
        %v1603 = vpop.xlane.xlu0 %1602
        %v1605 = vlaneseq
        %v1606 = vshrl.u32 %v1605, 7
        %v1607 = vsub.s32 0, %v1606
        %v1608 = vrot.slane %v1316, %v1607
        %v1610 = vmul.f32 %v1507, %v1608
        %v1611 = vmul.f32 %v1508, %v1608
        %v1612 = vsel %vm382, %v1610, 0.0
        %1613 = vadd.xlane.f32.xlu0 %v1612
        %v1614 = vpop.xlane.xlu0 %1613
        %v1615 = vsel %vm382, %v1611, 0.0
        %1616 = vadd.xlane.f32.xlu0 %v1615
        %v1617 = vpop.xlane.xlu0 %1616
        %v1618 = vadd.f32 %v1600, %v1614
        %v1619 = vadd.f32 %v1603, %v1617
        %v1621 = vlaneseq
        %v1622 = vshrl.u32 %v1621, 7
        %v1623 = vsub.s32 0, %v1622
        %v1624 = vrot.slane %v1318, %v1623
        %v1626 = vadd.f32 %v1618, %v1624
        %v1627 = vadd.f32 %v1619, %v1624
        %1629 = vset.pattern.permute.xlu0 0
        %1630 = vperm.xlu0 %1629, %v1626
        %v1631 = vpop.permute.xlu0 %1630
        %1634 = vset.pattern.permute.xlu0 0
        %1635 = vperm.xlu0 %1634, %v1627
        %v1636 = vpop.permute.xlu0 %1635
        %v1638 = vmul.f32 %v372, %v1631
        %v1639 = vmul.f32 %v373, %v1636
        %v1640 = vsel %vm478, %v1638, 0.0
        %v1641 = vsel %vm478, %v1639, 0.0
        %v1642 = vadd.f32 %v1640, %v1641
        %v1643 = vrot.slane %v1642, 4
        %v1644 = vadd.f32 %v1642, %v1643
        %v1645 = vrot.slane %v1644, 2
        %v1646 = vadd.f32 %v1644, %v1645
        %v1647 = vrot.slane %v1646, 1
        %v1648 = vadd.f32 %v1646, %v1647
        %v1649 = vmul.f32 %v1283, 0.5
        %v1650 = vceil.f32 %v1649
        %vm1651 = vcmp.gt.f32.partialorder %v1648, %v1631
        %vm1652 = vcmp.gt.f32.partialorder %v1648, %v1636
        %v1653 = vsel %vm1651, 1.0, 0.0
        %v1654 = vsel %vm1652, 1.0, 0.0
        %v1655 = vmul.f32 %v1653, %v1237
        %v1656 = vmul.f32 %v1654, %v1237
        %v1657 = vsel %vm478, %v1655, 0.0
        %1658 = vadd.xlane.f32.xlu0 %v1657
        %v1659 = vpop.xlane.xlu0 %1658
        %v1660 = vsel %vm478, %v1656, 0.0
        %1661 = vadd.xlane.f32.xlu0 %v1660
        %v1662 = vpop.xlane.xlu0 %1661
        %vm1663 = vcmp.lt.f32.partialorder %v1659, %v1650
        %vm1664 = vcmp.lt.f32.partialorder %v1662, %v1650
        %v1665 = vsel %vm1663, 1.0, 0.0
        %v1666 = vsel %vm1664, 1.0, 0.0
        %v1667 = vmul.f32 %v1215, %v1665
        %v1668 = vmul.f32 %v1216, %v1666
        %v1669 = vtanh.pop %v1626
        %v1670 = vtanh.pop %v1627
        %1672 = vset.pattern.permute.xlu0 0
        %1673 = vperm.xlu0 %1672, %v1669
        %v1674 = vpop.permute.xlu0 %1673
        %1677 = vset.pattern.permute.xlu0 0
        %1678 = vperm.xlu0 %1677, %v1670
        %v1679 = vpop.permute.xlu0 %1678
        %v1681 = vmul.f32 %v1507, %v1674
        %v1682 = vmul.f32 %v1508, %v1679
        %vm1683 = vcmp.gt.f32.partialorder %v1667, 0.0
        %vm1684 = vcmp.gt.f32.partialorder %v1668, 0.0
        %v1685 = vsel %vm1683, 1, 0
        %v1686 = vsel %vm1684, 1, 0
        %1687 = vset.pattern.permute.xlu0 0
        %1688 = vperm.xlu0 %1687, %v1685
        %v1689 = vpop.permute.xlu0 %1688
        %1690 = vset.pattern.permute.xlu0 0
        %1691 = vperm.xlu0 %1690, %v1686
        %v1692 = vpop.permute.xlu0 %1691
        %vm1693 = vcmp.eq.s32.totalorder %v1689, 1
        %vm1694 = vcmp.eq.s32.totalorder %v1692, 1
        %v1695 = vsel %vm1693, %v1681, -1e+30
        %v1696 = vsel %vm1694, %v1682, -1e+30
        %v1697 = vsel %vm382, %v1695, -inf
        %v1698 = vsel %vm382, %v1696, -inf
        %v1699 = vmax.f32 %v1697, %v1698
        %v1700 = vrot.slane %v1699, 4
        %v1701 = vmax.f32 %v1699, %v1700
        %v1702 = vrot.slane %v1701, 2
        %v1703 = vmax.f32 %v1701, %v1702
        %v1704 = vrot.slane %v1703, 1
        %v1705 = vmax.f32 %v1703, %v1704
        %v1706 = vsel %vm735, %v1667, 0.0
        %v1707 = vsel %vm735, %v1668, 0.0
        %v1708 = vadd.f32 %v1706, %v1707
        %v1709 = vrot.slane %v1708, 4
        %v1710 = vadd.f32 %v1708, %v1709
        %v1711 = vrot.slane %v1710, 2
        %v1712 = vadd.f32 %v1710, %v1711
        %v1713 = vrot.slane %v1712, 1
        %v1714 = vadd.f32 %v1712, %v1713
        %1716 = vset.pattern.permute.xlu0 0
        %1717 = vperm.xlu0 %1716, %v1667
        %v1718 = vpop.permute.xlu0 %1717
        %1721 = vset.pattern.permute.xlu0 0
        %1722 = vperm.xlu0 %1721, %v1668
        %v1723 = vpop.permute.xlu0 %1722
        %v1725 = vmul.f32 %v1681, %v1718
        %v1726 = vmul.f32 %v1682, %v1723
        %v1727 = vsel %vm382, %v1725, 0.0
        %v1728 = vsel %vm382, %v1726, 0.0
        %v1729 = vadd.f32 %v1727, %v1728
        %v1730 = vrot.slane %v1729, 4
        %v1731 = vadd.f32 %v1729, %v1730
        %v1732 = vrot.slane %v1731, 2
        %v1733 = vadd.f32 %v1731, %v1732
        %v1734 = vrot.slane %v1733, 1
        %v1735 = vadd.f32 %v1733, %v1734
        %1737 = vset.pattern.permute.xlu0 0
        %1738 = vperm.xlu0 %1737, %v1714
        %v1739 = vpop.permute.xlu0 %1738
        %v1741 = vrcp.pop %v1739
        %v1742 = vmul.f32 %v1735, %v1741
        %1744 = vrot.lane.b32.xlu0 %v849, 32
        %v1745 = vpop.permute.xlu0 %1744
        %1748 = vrot.lane.b32.xlu0 %v1274, 64
        %v1749 = vpop.permute.xlu0 %1748
        %1752 = vrot.lane.b32.xlu0 %v1301, 96
        %v1753 = vpop.permute.xlu0 %1752
        %1756 = vrot.lane.b32.xlu0 %v1742, 32
        %v1757 = vpop.permute.xlu0 %1756
        %v1759 = vsel %vm382, %v822, %v1745
        %vm1760 = vcmask 523264
        %v1761 = vsel %vm1760, %v1759, %v1749
        %vm1762 = vcmask 785408
        %v1763 = vsel %vm1762, %v1761, %v1753
        %v1764 = vsel %vm382, %v1705, %v1757
        %v1767 = vcombine.low %v1763, %v1764
        %v1769 = vunpack.c.l.s4 1966171168
        %v1770 = vunpack.c.0.s8 %v1769
        %v1771 = vlaneseq
        %v1772 = vshrl.u32 %v1771, 7
        %v1773 = vsub.s32 %v1770, %v1772
        %v1774 = vrot.slane %v1767, %v1773
        %v1776 = vunpack.c.l.s4 1966171168
        %v1777 = vunpack.c.0.s8 %v1776
        %v1778 = vlaneseq
        %v1779 = vshrl.u32 %v1778, 7
        %v1780 = vsub.s32 %v1777, %v1779
        %v1781 = vrot.slane %v1774, %v1780
        %v1783 = vlaneseq
        %vm1784 = vcmp.ge.s32.totalorder %v1783, 0
        %vm1785 = vcmp.lt.s32.totalorder %v1783, 192
        %vm1786 = vmand %vm1784, %vm1785
        %1787 = vst.msk [vmem:[%s358] sm:$0x3] %vm1786, %v1781
        %p1788 = scmp.lt.s32.totalorder %s20, 5
        %s1789 = scalar_select %p1788, %s20, 5
        %s1790 = smul.addr %s1789, 2
        %s1791 = scalar_lea.vmem %s8, %s1790
        // Predicated region
        $region57: #{forward.2} parent=51 // pred_check
          %p1792 = pneg %p221
        $region58: #{forward.2} parent=51 // pred_check_branch
          %1794 = sbr.rel (%p1792) target = $region60
        $region59: #{forward.2} parent=51 // pred_region
          _
        $region60: #{forward.2} parent=51 // pred_fallthru
          _
      $region52: #{forward.2} parent=5 // pred_fallthru
        _
      %p1795 = scmp.le.s32.totalorder 2, %s15
      // Predicated region
      $region61: #{forward.2} parent=5 // pred_check
        %p1796 = pneg %p1795
      $region62: #{forward.2} parent=5 // pred_check_branch
        %1798 = sbr.rel (%p1796) target = $region64
      $region63: #{forward.2} parent=5 // pred_region
        %s1799 = ssub.s32 %s15, 2
        // Predicated region
        $region65: #{forward.2} parent=63 // pred_check
          %p1800 = pneg %p227
        $region66: #{forward.2} parent=63 // pred_check_branch
          %1802 = sbr.rel (%p1800) target = $region68
        $region67: #{forward.2} parent=63 // pred_region
          %p1803 = scmp.lt.s32.totalorder %s21, 5
          %s1804 = scalar_select %p1803, %s21, 5
          %s1805 = smul.addr %s1804, 2
          %s1806 = scalar_lea.vmem %s8, %s1805
        $region68: #{forward.2} parent=63 // pred_fallthru
          _
      $region64: #{forward.2} parent=5 // pred_fallthru
        _
    $region6: #{forward.2} parent=1 // loop_footer
      %s19 = sadd.s32 1, %s15
    $region7: #{forward.2} parent=1 // loop_footer_branch
      %14 = sbr.rel target = $region3
    $region8: #{forward.2} parent=1 // loop_exit
      _
    %1807 = vsyncpa [#allocation3], 1
    %s1808 = scalar_lea.sflag [#allocation3], 1
    %1809 = vsyncpa %s1808, 1

</llo_original>
